<compile_context>
chip_gen: v6e
topology: v6e:2x2x1
jax: 0.10.0
libtpu: 0.0.40
codegen_flags: <defaults>
</compile_context>

<pallas_src>
import functools

import jax
import jax.numpy as jnp
from jax.experimental import pallas as pl
from jax.experimental.pallas import tpu as pltpu

PAD = 128  # lane width; every weight block is (PAD, PAD), every activation (TB, PAD)


def _round_up(x, m):
    return ((x + m - 1) // m) * m


def _koopman_kernel(xin_ref, w_ref, b_ref, out_ref, *, action_dim, latent_dim,
                    bi_off, obs_lower, obs_upper):
    """One batch tile of the full fused forward pass.

    xin_ref : (TB, 128) f32   cols [0:S) = state, cols [bi_off:bi_off+A*L) = repeated action
    w_ref   : (7, 128, 128) bf16 zero-padded weight blocks:
              0 w1, 1 w2, 2 w3,
              3 merged [K | Bi]  (K at cols 0..L-1, Bi at cols bi_off..),
              4 w3inv, 5 w2inv, 6 w1inv
    b_ref   : (8, 128) f32    rows 0..5 = b1, b2, b3, b3inv, b2inv, b1inv
    out_ref : (TB, 128) f32   cols [0:S) = clamped next state, rest garbage
    """
    x = xin_ref[...]            # (TB, 128) f32
    b = b_ref[...]              # (8, 128)  f32

    def mm(h, k):
        # bf16 MXU operands, f32 accumulation.
        return jnp.dot(h.astype(jnp.bfloat16), w_ref[k],
                       preferred_element_type=jnp.float32)

    # Encoder
    h = jnp.tanh(mm(x, 0) + b[0:1, :])
    h = jnp.tanh(mm(h, 1) + b[1:2, :])
    gt = jnp.tanh(mm(h, 2) + b[2:3, :])

    # Koopman bilinear step: one merged matmul gives
    #   y[:, 0:L]                   = K gt
    #   y[:, bi_off:bi_off + A*L]   = [B1 gt .. BA gt]
    y = mm(gt, 3)
    # x holds the repeated action exactly on the bilinear lanes, so x*y yields
    # a_i * (Bi gt) there.  Cols < S carry state*kg junk, but every roll below
    # sends that junk to cols >= L (since bi_off >= S and bi_off + A*L <= 128),
    # and the decoder block has zero rows >= L, so it never affects the result.
    ab = x * y
    gtp1 = y
    for i in range(action_dim):
        shift = (PAD - (bi_off + i * latent_dim)) % PAD
        gtp1 = gtp1 + pltpu.roll(ab, shift=shift, axis=1)   # XLU, off the MXU path

    # Decoder
    z = jnp.tanh(mm(gtp1, 4) + b[3:4, :])
    z = jnp.tanh(mm(z, 5) + b[4:5, :])
    z = mm(z, 6) + b[5:6, :]
    out_ref[...] = jnp.clip(z, obs_lower, obs_upper)


def pack_koopman_params(params, *, state_dim, action_dim, latent_dim):
    """One-time packing of the 16 weight/bias tensors into two VMEM-friendly slabs."""
    S, A, L = state_dim, action_dim, latent_dim
    H = params["w1"].shape[1]
    assert S <= PAD and H <= PAD and L <= PAD
    bi_off = max(_round_up(S, 8), _round_up(L, 8))   # bilinear lane offset
    assert bi_off >= L and bi_off >= S
    assert bi_off + A * L <= PAD, "state/latent/action dims too large for one 128-lane tile"

    def blk(mat, r0=0, c0=0):
        z = jnp.zeros((PAD, PAD), jnp.float32)
        return z.at[r0:r0 + mat.shape[0], c0:c0 + mat.shape[1]].set(
            mat.astype(jnp.float32))

    # Merged K/Bi block (column ranges are disjoint because bi_off >= L).
    kbi = blk(params["wk"]) + blk(params["wbi"], c0=bi_off)

    wslab = jnp.stack([
        blk(params["w1"]),     # 0: (S, H)
        blk(params["w2"]),     # 1: (H, H)
        blk(params["w3"]),     # 2: (H, L)
        kbi,                   # 3: merged (L, L) + (L, A*L)
        blk(params["w3i"]),    # 4: (L, H)
        blk(params["w2i"]),    # 5: (H, H)
        blk(params["w1i"]),    # 6: (H, S)
    ]).astype(jnp.bfloat16)    # (7, 128, 128) bf16

    bslab = jnp.zeros((8, PAD), jnp.float32)
    for j, name in enumerate(["b1", "b2", "b3", "b3i", "b2i", "b1i"]):
        v = params[name]
        bslab = bslab.at[j, :v.shape[0]].set(v.astype(jnp.float32))

    return wslab, bslab, bi_off


@functools.partial(
    jax.jit,
    static_argnames=("action_dim", "latent_dim", "bi_off",
                     "obs_lower", "obs_upper", "block_b"))
def koopman_bilinear_forward(state, action, wslab, bslab, *,
                             action_dim, latent_dim, bi_off,
                             obs_lower, obs_upper, block_b=None):
    """Fused forward pass. state: (B, S) f32, action: (B, A) f32."""
    B, S = state.shape
    A, L = action_dim, latent_dim
    assert action.shape[0] == B and action.shape[1] == A
    assert bi_off >= max(S, L) and bi_off + A * L <= PAD

    # Batch tiling: large tiles (amortize per-step overhead / MXU weight loads)
    # but aim for >= 2 grid steps so v7x can shard the "parallel" axis across
    # its two TensorCores.  Cap at 2048 rows (in+out double-buffered ~4 MiB).
    if block_b is None:
        TB = min(2048, _round_up(-(-B // 2), 8))
        TB = max(TB, 8)
    else:
        TB = max(8, _round_up(block_b, 8))
    Bp = _round_up(B, TB)
    grid = (Bp // TB,)

    # Single lane-dense activation slab: state + repeated action, zero elsewhere.
    # (Built inside this jit so it fuses with the producer / pallas_call.)
    xin = jnp.zeros((Bp, PAD), jnp.float32)
    xin = xin.at[:B, :S].set(state.astype(jnp.float32))
    xin = xin.at[:B, bi_off:bi_off + A * L].set(
        jnp.repeat(action.astype(jnp.float32), L, axis=1))

    kernel = functools.partial(
        _koopman_kernel,
        action_dim=A, latent_dim=L, bi_off=bi_off,
        obs_lower=float(obs_lower), obs_upper=float(obs_upper))

    nblk = wslab.shape[0]
    out = pl.pallas_call(
        kernel,
        out_shape=jax.ShapeDtypeStruct((Bp, PAD), jnp.float32),
        grid=grid,
        in_specs=[
            pl.BlockSpec((TB, PAD), lambda i: (i, 0)),                 # activations (streamed)
            pl.BlockSpec((nblk, PAD, PAD), lambda i: (0, 0, 0)),       # bf16 weights (resident)
            pl.BlockSpec((8, PAD), lambda i: (0, 0)),                  # f32 biases  (resident)
        ],
        out_specs=pl.BlockSpec((TB, PAD), lambda i: (i, 0)),           # lane-dense output tile
        compiler_params=pltpu.CompilerParams(
            dimension_semantics=("parallel",)),
    )(xin, wslab, bslab)

    return out[:B, :S]


def _init_linear(key, fan_in, fan_out, bias=True):
    """torch.nn.Linear default init (uniform +-1/sqrt(fan_in)), stored (in, out)."""
    kw, kb = jax.random.split(key)
    bound = 1.0 / jnp.sqrt(jnp.float32(fan_in))
    w = jax.random.uniform(kw, (fan_in, fan_out), jnp.float32, -bound, bound)
    b = jax.random.uniform(kb, (fan_out,), jnp.float32, -bound, bound) if bias else None
    return w, b


def _reference_forward(state, action, params, *, action_dim, latent_dim,
                       obs_lower, obs_upper):
    """Pure-JAX f32 reference replicating the PyTorch forward exactly."""
    y = jnp.tanh(state @ params["w1"] + params["b1"])
    y = jnp.tanh(y @ params["w2"] + params["b2"])
    gt = jnp.tanh(y @ params["w3"] + params["b3"])
    kg = gt @ params["wk"]
    bi = gt @ params["wbi"]
    out = kg
    for i in range(action_dim):
        out = out + action[:, i:i + 1] * bi[:, i * latent_dim:(i + 1) * latent_dim]
    z = jnp.tanh(out @ params["w3i"] + params["b3i"])
    z = jnp.tanh(z @ params["w2i"] + params["b2i"])
    z = z @ params["w1i"] + params["b1i"]
    return jnp.clip(z, obs_lower, obs_upper)


if __name__ == "__main__":
    # Small shapes consistent with the module (env.observation/action spaces).
    B = 256          # batch (tiled by the grid)
    STATE_DIM = 6    # env.observation_space.shape[0]
    ACTION_DIM = 2   # env.action_space.shape[0]
    LATENT_DIM = 8
    HIDDEN_DIM = 32
    OBS_LOW, OBS_HIGH = -10.0, 10.0

    root = jax.random.PRNGKey(0)
    keys = jax.random.split(root, 12)

    w1, b1 = _init_linear(keys[0], STATE_DIM, HIDDEN_DIM)
    w2, b2 = _init_linear(keys[1], HIDDEN_DIM, HIDDEN_DIM)
    w3, b3 = _init_linear(keys[2], HIDDEN_DIM, LATENT_DIM)
    wk, _ = _init_linear(keys[3], LATENT_DIM, LATENT_DIM, bias=False)
    wbi, _ = _init_linear(keys[4], LATENT_DIM, LATENT_DIM * ACTION_DIM, bias=False)
    w3i, b3i = _init_linear(keys[5], LATENT_DIM, HIDDEN_DIM)
    w2i, b2i = _init_linear(keys[6], HIDDEN_DIM, HIDDEN_DIM)
    w1i, b1i = _init_linear(keys[7], HIDDEN_DIM, STATE_DIM)

    params = dict(
        w1=w1, b1=b1, w2=w2, b2=b2, w3=w3, b3=b3,
        wk=wk, wbi=wbi,
        w3i=w3i, b3i=b3i, w2i=w2i, b2i=b2i, w1i=w1i, b1i=b1i,
    )

    state = jax.random.normal(keys[8], (B, STATE_DIM), jnp.float32)
    action = jax.random.normal(keys[9], (B, ACTION_DIM), jnp.float32)

    # One-time parameter packing (done at "init", not per forward call).
    wslab, bslab, bi_off = pack_koopman_params(
        params, state_dim=STATE_DIM, action_dim=ACTION_DIM, latent_dim=LATENT_DIM)
    wslab, bslab = jax.block_until_ready((wslab, bslab))

    out = koopman_bilinear_forward(
        state, action, wslab, bslab,
        action_dim=ACTION_DIM, latent_dim=LATENT_DIM, bi_off=bi_off,
        obs_lower=OBS_LOW, obs_upper=OBS_HIGH,
    )
    out = jax.block_until_ready(out)

    ref = _reference_forward(
        state, action, params,
        action_dim=ACTION_DIM, latent_dim=LATENT_DIM,
        obs_lower=OBS_LOW, obs_upper=OBS_HIGH,
    )
    assert out.shape == (B, STATE_DIM)
    # bf16 MXU operands vs. f32 reference -> relaxed tolerance.
    assert jnp.allclose(out, ref, atol=5e-2, rtol=5e-2), "mismatch vs reference"

    # TODO(synk): Symmetry_* / solve_eig / solve_sylvester helpers (scipy eig /
    # sylvester solves) are host-side utilities outside forward() and are not
    # implemented as Pallas kernels.
    print("KERNEL_OK")
</pallas_src>

<mosaic_0001>
module attributes {stable_mosaic.version = 11 : i64} {
  func.func @_koopman_kernel(%arg0: i32, %arg1: memref<128x128xf32, #tpu.memory_space<vmem>>, %arg2: memref<7x128x128xbf16, #tpu.memory_space<vmem>>, %arg3: memref<8x128xf32, #tpu.memory_space<vmem>>, %arg4: memref<128x128xf32, #tpu.memory_space<vmem>>) attributes {dimension_semantics = [#tpu.dimension_semantics<parallel>], iteration_bounds = array<i64: 2>, scalar_prefetch = 0 : i64, scratch_operands = 0 : i64, tpu.core_type = #tpu.core_type<tc>, window_params = [{transform_indices = @transform_0, window_bounds = array<i64: 128, 128>}, {pipeline_mode = #tpu.pipeline_mode<synchronous>, transform_indices = @transform_1, window_bounds = array<i64: 7, 128, 128>}, {pipeline_mode = #tpu.pipeline_mode<synchronous>, transform_indices = @transform_2, window_bounds = array<i64: 8, 128>}, {transform_indices = @transform_3, window_bounds = array<i64: 128, 128>}]} {
    %c0 = arith.constant 0 : index
    %c0_0 = arith.constant 0 : index
    %0 = vector.load %arg1[%c0, %c0_0] : memref<128x128xf32, #tpu.memory_space<vmem>>, vector<128x128xf32>
    %c0_1 = arith.constant 0 : index
    %c0_2 = arith.constant 0 : index
    %1 = vector.load %arg3[%c0_1, %c0_2] : memref<8x128xf32, #tpu.memory_space<vmem>>, vector<8x128xf32>
    %2 = arith.truncf %0 : vector<128x128xf32> to vector<128x128xbf16>
    %c0_3 = arith.constant 0 : index
    %c0_4 = arith.constant 0 : index
    %c0_5 = arith.constant 0 : index
    %3 = vector.load %arg2[%c0_3, %c0_4, %c0_5] : memref<7x128x128xbf16, #tpu.memory_space<vmem>>, vector<1x128x128xbf16>
    %4 = vector.shape_cast %3 : vector<1x128x128xbf16> to vector<128x128xbf16>
    %cst = arith.constant dense<0.000000e+00> : vector<128x128xf32>
    %5 = tpu.matmul %2, %4, %cst {dimension_numbers = #tpu.dot_dimension_numbers<[1], [0], [0], [1], [0, 0, 1, 1], [], []>} : vector<128x128xbf16>, vector<128x128xbf16>, vector<128x128xf32> -> vector<128x128xf32>
    %6 = vector.extract_strided_slice %1 {offsets = [0, 0], sizes = [1, 128], strides = [1, 1]} : vector<8x128xf32> to vector<1x128xf32>
    %7 = vector.broadcast %6 : vector<1x128xf32> to vector<128x128xf32>
    %8 = arith.addf %5, %7 : vector<128x128xf32>
    %9 = math.tanh %8 : vector<128x128xf32>
    %10 = arith.truncf %9 : vector<128x128xf32> to vector<128x128xbf16>
    %c1 = arith.constant 1 : index
    %c0_6 = arith.constant 0 : index
    %c0_7 = arith.constant 0 : index
    %11 = vector.load %arg2[%c1, %c0_6, %c0_7] : memref<7x128x128xbf16, #tpu.memory_space<vmem>>, vector<1x128x128xbf16>
    %12 = vector.shape_cast %11 : vector<1x128x128xbf16> to vector<128x128xbf16>
    %cst_8 = arith.constant dense<0.000000e+00> : vector<128x128xf32>
    %13 = tpu.matmul %10, %12, %cst_8 {dimension_numbers = #tpu.dot_dimension_numbers<[1], [0], [0], [1], [0, 0, 1, 1], [], []>} : vector<128x128xbf16>, vector<128x128xbf16>, vector<128x128xf32> -> vector<128x128xf32>
    %14 = vector.extract_strided_slice %1 {offsets = [1, 0], sizes = [1, 128], strides = [1, 1]} : vector<8x128xf32> to vector<1x128xf32>
    %15 = vector.broadcast %14 : vector<1x128xf32> to vector<128x128xf32>
    %16 = arith.addf %13, %15 : vector<128x128xf32>
    %17 = math.tanh %16 : vector<128x128xf32>
    %18 = arith.truncf %17 : vector<128x128xf32> to vector<128x128xbf16>
    %c2 = arith.constant 2 : index
    %c0_9 = arith.constant 0 : index
    %c0_10 = arith.constant 0 : index
    %19 = vector.load %arg2[%c2, %c0_9, %c0_10] : memref<7x128x128xbf16, #tpu.memory_space<vmem>>, vector<1x128x128xbf16>
    %20 = vector.shape_cast %19 : vector<1x128x128xbf16> to vector<128x128xbf16>
    %cst_11 = arith.constant dense<0.000000e+00> : vector<128x128xf32>
    %21 = tpu.matmul %18, %20, %cst_11 {dimension_numbers = #tpu.dot_dimension_numbers<[1], [0], [0], [1], [0, 0, 1, 1], [], []>} : vector<128x128xbf16>, vector<128x128xbf16>, vector<128x128xf32> -> vector<128x128xf32>
    %22 = vector.extract_strided_slice %1 {offsets = [2, 0], sizes = [1, 128], strides = [1, 1]} : vector<8x128xf32> to vector<1x128xf32>
    %23 = vector.broadcast %22 : vector<1x128xf32> to vector<128x128xf32>
    %24 = arith.addf %21, %23 : vector<128x128xf32>
    %25 = math.tanh %24 : vector<128x128xf32>
    %26 = arith.truncf %25 : vector<128x128xf32> to vector<128x128xbf16>
    %c3 = arith.constant 3 : index
    %c0_12 = arith.constant 0 : index
    %c0_13 = arith.constant 0 : index
    %27 = vector.load %arg2[%c3, %c0_12, %c0_13] : memref<7x128x128xbf16, #tpu.memory_space<vmem>>, vector<1x128x128xbf16>
    %28 = vector.shape_cast %27 : vector<1x128x128xbf16> to vector<128x128xbf16>
    %cst_14 = arith.constant dense<0.000000e+00> : vector<128x128xf32>
    %29 = tpu.matmul %26, %28, %cst_14 {dimension_numbers = #tpu.dot_dimension_numbers<[1], [0], [0], [1], [0, 0, 1, 1], [], []>} : vector<128x128xbf16>, vector<128x128xbf16>, vector<128x128xf32> -> vector<128x128xf32>
    %30 = arith.mulf %0, %29 : vector<128x128xf32>
    %c120_i32 = arith.constant 120 : i32
    %31 = tpu.dynamic_rotate %30 by %c120_i32 dim 1 : vector<128x128xf32>, i32 -> vector<128x128xf32>
    %32 = arith.addf %29, %31 : vector<128x128xf32>
    %c112_i32 = arith.constant 112 : i32
    %33 = tpu.dynamic_rotate %30 by %c112_i32 dim 1 : vector<128x128xf32>, i32 -> vector<128x128xf32>
    %34 = arith.addf %32, %33 : vector<128x128xf32>
    %35 = arith.truncf %34 : vector<128x128xf32> to vector<128x128xbf16>
    %c4 = arith.constant 4 : index
    %c0_15 = arith.constant 0 : index
    %c0_16 = arith.constant 0 : index
    %36 = vector.load %arg2[%c4, %c0_15, %c0_16] : memref<7x128x128xbf16, #tpu.memory_space<vmem>>, vector<1x128x128xbf16>
    %37 = vector.shape_cast %36 : vector<1x128x128xbf16> to vector<128x128xbf16>
    %cst_17 = arith.constant dense<0.000000e+00> : vector<128x128xf32>
    %38 = tpu.matmul %35, %37, %cst_17 {dimension_numbers = #tpu.dot_dimension_numbers<[1], [0], [0], [1], [0, 0, 1, 1], [], []>} : vector<128x128xbf16>, vector<128x128xbf16>, vector<128x128xf32> -> vector<128x128xf32>
    %39 = vector.extract_strided_slice %1 {offsets = [3, 0], sizes = [1, 128], strides = [1, 1]} : vector<8x128xf32> to vector<1x128xf32>
    %40 = vector.broadcast %39 : vector<1x128xf32> to vector<128x128xf32>
    %41 = arith.addf %38, %40 : vector<128x128xf32>
    %42 = math.tanh %41 : vector<128x128xf32>
    %43 = arith.truncf %42 : vector<128x128xf32> to vector<128x128xbf16>
    %c5 = arith.constant 5 : index
    %c0_18 = arith.constant 0 : index
    %c0_19 = arith.constant 0 : index
    %44 = vector.load %arg2[%c5, %c0_18, %c0_19] : memref<7x128x128xbf16, #tpu.memory_space<vmem>>, vector<1x128x128xbf16>
    %45 = vector.shape_cast %44 : vector<1x128x128xbf16> to vector<128x128xbf16>
    %cst_20 = arith.constant dense<0.000000e+00> : vector<128x128xf32>
    %46 = tpu.matmul %43, %45, %cst_20 {dimension_numbers = #tpu.dot_dimension_numbers<[1], [0], [0], [1], [0, 0, 1, 1], [], []>} : vector<128x128xbf16>, vector<128x128xbf16>, vector<128x128xf32> -> vector<128x128xf32>
    %47 = vector.extract_strided_slice %1 {offsets = [4, 0], sizes = [1, 128], strides = [1, 1]} : vector<8x128xf32> to vector<1x128xf32>
    %48 = vector.broadcast %47 : vector<1x128xf32> to vector<128x128xf32>
    %49 = arith.addf %46, %48 : vector<128x128xf32>
    %50 = math.tanh %49 : vector<128x128xf32>
    %51 = arith.truncf %50 : vector<128x128xf32> to vector<128x128xbf16>
    %c6 = arith.constant 6 : index
    %c0_21 = arith.constant 0 : index
    %c0_22 = arith.constant 0 : index
    %52 = vector.load %arg2[%c6, %c0_21, %c0_22] : memref<7x128x128xbf16, #tpu.memory_space<vmem>>, vector<1x128x128xbf16>
    %53 = vector.shape_cast %52 : vector<1x128x128xbf16> to vector<128x128xbf16>
    %cst_23 = arith.constant dense<0.000000e+00> : vector<128x128xf32>
    %54 = tpu.matmul %51, %53, %cst_23 {dimension_numbers = #tpu.dot_dimension_numbers<[1], [0], [0], [1], [0, 0, 1, 1], [], []>} : vector<128x128xbf16>, vector<128x128xbf16>, vector<128x128xf32> -> vector<128x128xf32>
    %55 = vector.extract_strided_slice %1 {offsets = [5, 0], sizes = [1, 128], strides = [1, 1]} : vector<8x128xf32> to vector<1x128xf32>
    %56 = vector.broadcast %55 : vector<1x128xf32> to vector<128x128xf32>
    %57 = arith.addf %54, %56 : vector<128x128xf32>
    %cst_24 = arith.constant -1.000000e+01 : f32
    %cst_25 = arith.constant 1.000000e+01 : f32
    %58 = vector.broadcast %cst_24 : f32 to vector<128x128xf32>
    %59 = arith.maximumf %58, %57 : vector<128x128xf32>
    %60 = vector.broadcast %cst_25 : f32 to vector<128x128xf32>
    %61 = arith.minimumf %60, %59 : vector<128x128xf32>
    %c0_26 = arith.constant 0 : index
    %c0_27 = arith.constant 0 : index
    %62 = vector.load %arg4[%c0_26, %c0_27] : memref<128x128xf32, #tpu.memory_space<vmem>>, vector<128x128xf32>
    tpu.vector_store %arg4[%c0_26, %c0_27], %61 {strides = array<i32>} : memref<128x128xf32, #tpu.memory_space<vmem>>, vector<128x128xf32>,
    return
  }
  func.func @transform_0(%arg0: i32) -> (i32, i32) {
    %c0_i32 = arith.constant 0 : i32
    %c0_i32_0 = arith.constant 0 : i32
    return %arg0, %c0_i32 : i32, i32
  }
  func.func @transform_1(%arg0: i32) -> (i32, i32, i32) {
    %c0_i32 = arith.constant 0 : i32
    %c0_i32_0 = arith.constant 0 : i32
    %c0_i32_1 = arith.constant 0 : i32
    %c0_i32_2 = arith.constant 0 : i32
    return %c0_i32, %c0_i32_0, %c0_i32_1 : i32, i32, i32
  }
  func.func @transform_2(%arg0: i32) -> (i32, i32) {
    %c0_i32 = arith.constant 0 : i32
    %c0_i32_0 = arith.constant 0 : i32
    %c0_i32_1 = arith.constant 0 : i32
    return %c0_i32, %c0_i32_0 : i32, i32
  }
  func.func @transform_3(%arg0: i32) -> (i32, i32) {
    %c0_i32 = arith.constant 0 : i32
    %c0_i32_0 = arith.constant 0 : i32
    return %arg0, %c0_i32 : i32, i32
  }
}

</mosaic_0001>

<llo_original>
// kernel: koopman_bilinear_forward.1
$region0: #{koopman_bilinear_forward.1}
  #allocation0 [shape = 'u32[]', space=smem, size = 0x4, offset = 0x4, fixed_abs, tag = 'smem constant byte address 0x4 - core index']
  #allocation1 [shape = 'u32[144,128]{1,0:T(1,128)}', space=vmem, size = 0x12000, scoped, tag = 'internal scratch']
  %s0 = inlined_call_operand.vmem [shape: f32[256,128], index: 0, kind: input, shape index: {}]
  %s1 = inlined_call_operand.vmem [shape: bf16[7,128,128], index: 1, kind: input, shape index: {}]
  %s2 = inlined_call_operand.vmem [shape: f32[8,128], index: 2, kind: input, shape index: {}]
  %s3 = inlined_call_operand.vmem [shape: f32[256,128], index: 3, kind: output, shape index: {}]
  %s4 = sld [smem:[#allocation0]]
  $region45: #{koopman_bilinear_forward.1} parent=0
    _
  %s6 = ssub.s32 1, %s4
  %s7 = scalar_select 0, %s6, %s4
  loop: start=0, step=1, limit=4
  $region2: #{koopman_bilinear_forward.1} parent=0 // loop_pre_header
    _
  $region3: #{koopman_bilinear_forward.1} parent=0 // loop_header
    %s9 = sphi 0, %s13
    %p10 = scmp.ge.s32.totalorder %s9, 4
    %s19 = sphi 0, %s21
    %s22 = sphi 0, %s19
    %s23 = sphi 0, %s22
    %s39 = sphi 0, %s23
    %s43 = sphi 0, %s43
    %s45 = sphi 0, %s43
    %s46 = sphi 0, %s45
    %s60 = sphi 0, %s46
    %s64 = sphi 0, %s64
    %s66 = sphi 0, %s64
    %s67 = sphi 0, %s66
    %s81 = sphi 0, %s67
    %s87 = sphi 0, %s89
    %s90 = sphi 0, %s87
    %s91 = sphi 0, %s90
    %s107 = sphi 0, %s91
  $region4: #{koopman_bilinear_forward.1} parent=0 // loop_header_branch
    %12 = sbr.rel (%p10) target = $region8
  $region5: #{koopman_bilinear_forward.1} parent=0 // loop_body
    %s14 = ssub.s32 %s9, 1
    %s15 = ssub.s32 %s9, 2
    %s16 = sadd.s32 %s9, 1
    %s17 = ssub.s32 %s9, %s16
    %p18 = scmp.eq.s32.totalorder %s17, 0
    %s20 = sadd.s32 %s19, 1
    %s21 = scalar_select %p18, %s19, %s20
    %p24 = pneg %p18
    %p25 = scmp.eq.s32.totalorder %s9, 1
    %p26 = por %p24, %p25
    %p27 = scmp.ne.s32.totalorder %s19, %s22
    %p28 = scmp.eq.s32.totalorder %s9, 0
    %p29 = por %p27, %p28
    %p30 = scmp.ne.s32.totalorder %s19, %s22
    %p31 = scmp.eq.s32.totalorder %s14, 1
    %p32 = por %p30, %p31
    %p33 = scmp.ne.s32.totalorder %s22, %s23
    %p34 = scmp.eq.s32.totalorder %s14, 0
    %p35 = por %p33, %p34
    %p36 = scmp.ne.s32.totalorder %s22, %s23
    %p37 = scmp.eq.s32.totalorder %s15, 1
    %p38 = por %p36, %p37
    %p40 = scmp.ne.s32.totalorder %s23, %s39
    %p41 = scmp.eq.s32.totalorder %s15, 0
    %p42 = por %p40, %p41
    %s44 = sadd.s32 %s43, 1
    %p47 = scmp.eq.s32.totalorder %s9, 1
    %p48 = scmp.ne.s32.totalorder %s43, %s45
    %p49 = scmp.eq.s32.totalorder %s9, 0
    %p50 = por %p48, %p49
    %p51 = scmp.ne.s32.totalorder %s43, %s45
    %p52 = scmp.eq.s32.totalorder %s14, 1
    %p53 = por %p51, %p52
    %p54 = scmp.ne.s32.totalorder %s45, %s46
    %p55 = scmp.eq.s32.totalorder %s14, 0
    %p56 = por %p54, %p55
    %p57 = scmp.ne.s32.totalorder %s45, %s46
    %p58 = scmp.eq.s32.totalorder %s15, 1
    %p59 = por %p57, %p58
    %p61 = scmp.ne.s32.totalorder %s46, %s60
    %p62 = scmp.eq.s32.totalorder %s15, 0
    %p63 = por %p61, %p62
    %s65 = sadd.s32 %s64, 1
    %p68 = scmp.eq.s32.totalorder %s9, 1
    %p69 = scmp.ne.s32.totalorder %s64, %s66
    %p70 = scmp.eq.s32.totalorder %s9, 0
    %p71 = por %p69, %p70
    %p72 = scmp.ne.s32.totalorder %s64, %s66
    %p73 = scmp.eq.s32.totalorder %s14, 1
    %p74 = por %p72, %p73
    %p75 = scmp.ne.s32.totalorder %s66, %s67
    %p76 = scmp.eq.s32.totalorder %s14, 0
    %p77 = por %p75, %p76
    %p78 = scmp.ne.s32.totalorder %s66, %s67
    %p79 = scmp.eq.s32.totalorder %s15, 1
    %p80 = por %p78, %p79
    %p82 = scmp.ne.s32.totalorder %s67, %s81
    %p83 = scmp.eq.s32.totalorder %s15, 0
    %p84 = por %p82, %p83
    %s85 = ssub.s32 %s9, %s16
    %p86 = scmp.eq.s32.totalorder %s85, 0
    %s88 = sadd.s32 %s87, 1
    %s89 = scalar_select %p86, %s87, %s88
    %p92 = pneg %p86
    %p93 = scmp.eq.s32.totalorder %s9, 1
    %p94 = por %p92, %p93
    %p95 = scmp.ne.s32.totalorder %s87, %s90
    %p96 = scmp.eq.s32.totalorder %s9, 0
    %p97 = por %p95, %p96
    %p98 = scmp.ne.s32.totalorder %s87, %s90
    %p99 = scmp.eq.s32.totalorder %s14, 1
    %p100 = por %p98, %p99
    %p101 = scmp.ne.s32.totalorder %s90, %s91
    %p102 = scmp.eq.s32.totalorder %s14, 0
    %p103 = por %p101, %p102
    %p104 = scmp.ne.s32.totalorder %s90, %s91
    %p105 = scmp.eq.s32.totalorder %s15, 1
    %p106 = por %p104, %p105
    %p108 = scmp.ne.s32.totalorder %s91, %s107
    %p109 = scmp.eq.s32.totalorder %s15, 0
    %p110 = por %p108, %p109
    %p111 = scmp.le.s32.totalorder 1, %s9
    %p112 = scmp.lt.s32.totalorder %s9, 3
    %p113 = pnand %p111, %p112
    %p114 = pneg %p113
    // Predicated region
    $region9: #{koopman_bilinear_forward.1} parent=5 // pred_check
      _
    $region10: #{koopman_bilinear_forward.1} parent=5 // pred_check_branch
      %116 = sbr.rel (%p113) target = $region12
    $region11: #{koopman_bilinear_forward.1} parent=5 // pred_region
      %s117 = ssub.s32 %s9, 1
      // Predicated region
      $region13: #{koopman_bilinear_forward.1} parent=11 // pred_check
        %p118 = pneg %p56
      $region14: #{koopman_bilinear_forward.1} parent=11 // pred_check_branch
        %120 = sbr.rel (%p118) target = $region16
      $region15: #{koopman_bilinear_forward.1} parent=11 // pred_region
        _
      $region16: #{koopman_bilinear_forward.1} parent=11 // pred_fallthru
        _
      // Predicated region
      $region17: #{koopman_bilinear_forward.1} parent=11 // pred_check
        %p121 = pneg %p77
      $region18: #{koopman_bilinear_forward.1} parent=11 // pred_check_branch
        %123 = sbr.rel (%p121) target = $region20
      $region19: #{koopman_bilinear_forward.1} parent=11 // pred_region
        _
      $region20: #{koopman_bilinear_forward.1} parent=11 // pred_fallthru
        _
    $region12: #{koopman_bilinear_forward.1} parent=5 // pred_fallthru
      _
    %p124 = scmp.lt.s32.totalorder %s9, 2
    // Predicated region
    $region21: #{koopman_bilinear_forward.1} parent=5 // pred_check
      %p125 = pneg %p124
    $region22: #{koopman_bilinear_forward.1} parent=5 // pred_check_branch
      %127 = sbr.rel (%p125) target = $region24
    $region23: #{koopman_bilinear_forward.1} parent=5 // pred_region
      // Predicated region
      $region25: #{koopman_bilinear_forward.1} parent=23 // pred_check
        %p128 = pneg %p29
      $region26: #{koopman_bilinear_forward.1} parent=23 // pred_check_branch
        %130 = sbr.rel (%p128) target = $region28
      $region27: #{koopman_bilinear_forward.1} parent=23 // pred_region
        %s131 = smul.u32 16, %s9
        %p132 = scmp.lt.s32.totalorder %s131, 31
        %s133 = scalar_select %p132, %s131, 31
        %s134 = smul.addr %s133, 8
        %s135 = scalar_lea.vmem %s0, %s134
        %s136 = smul.u32 16, %s9
      $region28: #{koopman_bilinear_forward.1} parent=23 // pred_fallthru
        _
    $region24: #{koopman_bilinear_forward.1} parent=5 // pred_fallthru
      _
    %p137 = scmp.le.s32.totalorder 1, %s9
    %p138 = scmp.lt.s32.totalorder %s9, 3
    %p139 = pnand %p137, %p138
    %p140 = pneg %p139
    // Predicated region
    $region29: #{koopman_bilinear_forward.1} parent=5 // pred_check
      _
    $region30: #{koopman_bilinear_forward.1} parent=5 // pred_check_branch
      %142 = sbr.rel (%p139) target = $region32
    $region31: #{koopman_bilinear_forward.1} parent=5 // pred_region
      %s143 = ssub.s32 %s9, 1
      %s144 = smul.u32 16, %s14
      %p145 = scmp.lt.s32.totalorder %s144, 31
      %s146 = scalar_select %p145, %s144, 31
      %s147 = smul.addr %s146, 8
      %s148 = scalar_lea.vmem %s0, %s147
      %p149 = pneg %p35
      %p150 = pneg %p32
      %p151 = pneg %p56
      %p152 = pneg %p53
      %p153 = pneg %p77
      %p154 = pneg %p74
      %p155 = pneg %p103
      %p156 = pneg %p100
      %s157 = smul.u32 16, %s14
      %p158 = scmp.lt.s32.totalorder %s157, 31
      %s159 = scalar_select %p158, %s157, 31
      %s160 = smul.addr %s159, 8
      %s161 = scalar_lea.vmem %s3, %s160
      %s162 = smul.u32 16, %s14
      %p163 = scmp.lt.s32.totalorder %s162, 31
      %s164 = scalar_select %p163, %s162, 31
      %s165 = smul.addr %s164, 8
      %s166 = scalar_lea.vmem %s0, %s165
      %s167 = smul.u32 16, %s14
      %s168 = smul.u32 16, %s14
      %p169 = scmp.lt.s32.totalorder %s168, 31
      %s170 = scalar_select %p169, %s168, 31
      %s171 = smul.addr %s170, 8
      %s172 = scalar_lea.vmem %s3, %s171
      %s173 = smul.u32 16, %s14
      %v175 = vld [vmem:[%s166] sm:$0xff]
      %v176 = vld [vmem:[%s166 + $0x8] sm:$0xff]
      %v177 = vld [vmem:[%s166 + $0x10] sm:$0xff]
      %v178 = vld [vmem:[%s166 + $0x18] sm:$0xff]
      %v179 = vld [vmem:[%s166 + $0x20] sm:$0xff]
      %v180 = vld [vmem:[%s166 + $0x28] sm:$0xff]
      %v181 = vld [vmem:[%s166 + $0x30] sm:$0xff]
      %v182 = vld [vmem:[%s166 + $0x38] sm:$0xff]
      %v183 = vld [vmem:[%s166 + $0x40] sm:$0xff]
      %v184 = vld [vmem:[%s166 + $0x48] sm:$0xff]
      %v185 = vld [vmem:[%s166 + $0x50] sm:$0xff]
      %v186 = vld [vmem:[%s166 + $0x58] sm:$0xff]
      %v187 = vld [vmem:[%s166 + $0x60] sm:$0xff]
      %v188 = vld [vmem:[%s166 + $0x68] sm:$0xff]
      %v189 = vld [vmem:[%s166 + $0x70] sm:$0xff]
      %v190 = vld [vmem:[%s166 + $0x78] sm:$0xff]
      %v191 = vld [vmem:[%s2] sm:$0xff]
      %v192 = vpack.c.bf16 %v176, %v175
      %v193 = vpack.c.bf16 %v178, %v177
      %v194 = vpack.c.bf16 %v180, %v179
      %v195 = vpack.c.bf16 %v182, %v181
      %v196 = vpack.c.bf16 %v184, %v183
      %v197 = vpack.c.bf16 %v186, %v185
      %v198 = vpack.c.bf16 %v188, %v187
      %v199 = vpack.c.bf16 %v190, %v189
      %v200 = vld [vmem:[%s1] sm:$0xf]
      %v201 = vld [vmem:[%s1 + $0x4] sm:$0xf]
      %v202 = vld [vmem:[%s1 + $0x8] sm:$0xf]
      %v203 = vld [vmem:[%s1 + $0xc] sm:$0xf]
      %v204 = vld [vmem:[%s1 + $0x10] sm:$0xf]
      %v205 = vld [vmem:[%s1 + $0x14] sm:$0xf]
      %v206 = vld [vmem:[%s1 + $0x18] sm:$0xf]
      %v207 = vld [vmem:[%s1 + $0x1c] sm:$0xf]
      %v208 = vld [vmem:[%s1 + $0x20] sm:$0xf]
      %v209 = vld [vmem:[%s1 + $0x24] sm:$0xf]
      %v210 = vld [vmem:[%s1 + $0x28] sm:$0xf]
      %v211 = vld [vmem:[%s1 + $0x2c] sm:$0xf]
      %v212 = vld [vmem:[%s1 + $0x30] sm:$0xf]
      %v213 = vld [vmem:[%s1 + $0x34] sm:$0xf]
      %v214 = vld [vmem:[%s1 + $0x38] sm:$0xf]
      %v215 = vld [vmem:[%s1 + $0x3c] sm:$0xf]
      %v216 = vlaneseq
      %v217 = vshrl.u32 %v216, 7
      %v218 = vsub.s32 0, %v217
      %v219 = vrot.slane %v191, %v218
      %v236 = vunpack.c.l.b16 %v200
      %v237 = vunpack.c.l.b16 %v201
      %v238 = vunpack.c.l.b16 %v202
      %v239 = vunpack.c.l.b16 %v203
      %v240 = vunpack.c.l.b16 %v204
      %v241 = vunpack.c.l.b16 %v205
      %v242 = vunpack.c.l.b16 %v206
      %v243 = vunpack.c.l.b16 %v207
      %v244 = vunpack.c.l.b16 %v208
      %v245 = vunpack.c.l.b16 %v209
      %v246 = vunpack.c.l.b16 %v210
      %v247 = vunpack.c.l.b16 %v211
      %v248 = vunpack.c.l.b16 %v212
      %v249 = vunpack.c.l.b16 %v213
      %v250 = vunpack.c.l.b16 %v214
      %v251 = vunpack.c.l.b16 %v215
      %v252 = vpack.c.b16 %v237, %v236
      %v253 = vpack.c.b16 %v239, %v238
      %v254 = vpack.c.b16 %v241, %v240
      %v255 = vpack.c.b16 %v243, %v242
      %v256 = vpack.c.b16 %v245, %v244
      %v257 = vpack.c.b16 %v247, %v246
      %v258 = vpack.c.b16 %v249, %v248
      %v259 = vpack.c.b16 %v251, %v250
      %268 = vmatprep.subr.bf16.mxu0 0
      %269 = vmatpush1.bf16.msra.mxu0 %v259
      %270 = vmatprep.subr.bf16.mxu0 0
      %271 = vmatpush1.bf16.msra.mxu0 %v258
      %272 = vmatprep.subr.bf16.mxu0 0
      %273 = vmatpush1.bf16.msra.mxu0 %v257
      %274 = vmatprep.subr.bf16.mxu0 0
      %275 = vmatpush1.bf16.msra.mxu0 %v256
      %276 = vmatprep.subr.bf16.mxu0 0
      %277 = vmatpush1.bf16.msra.mxu0 %v255
      %278 = vmatprep.subr.bf16.mxu0 0
      %279 = vmatpush1.bf16.msra.mxu0 %v254
      %280 = vmatprep.subr.bf16.mxu0 0
      %281 = vmatpush1.bf16.msra.mxu0 %v253
      %282 = vmatprep.subr.bf16.mxu0 0
      %283 = vmatpush1.bf16.msra.mxu0 %v252
      %284 = vmatprep.subr.bf16.mxu0 0
      %285 = vmatpush2.bf16.msra.mxu0 0
      %286 = vmatprep.subr.bf16.mxu0 0
      %287 = vmatpush2.bf16.msra.mxu0 0
      %288 = vmatprep.subr.bf16.mxu0 0
      %289 = vmatpush2.bf16.msra.mxu0 0
      %290 = vmatprep.subr.bf16.mxu0 0
      %291 = vmatpush2.bf16.msra.mxu0 0
      %292 = vmatprep.subr.bf16.mxu0 0
      %293 = vmatpush2.bf16.msra.mxu0 0
      %294 = vmatprep.subr.bf16.mxu0 0
      %295 = vmatpush2.bf16.msra.mxu0 0
      %296 = vmatprep.subr.bf16.mxu0 0
      %297 = vmatpush2.bf16.msra.mxu0 0
      %298 = vmatprep.subr.bf16.mxu0 0
      %299 = vmatpush2.bf16.msra.mxu0 0
      %300 = vmatprep.mubr.bf16.mxu0 0
      %301 = vmatmul.mubr.bf16.gmra.mxu0 %v192
      %v302 = vpop.f32.mrf.mxu0
      %v303 = vadd.f32 %v219, %v302
      %v304 = vpop.f32.mrf.mxu0
      %v305 = vpop.f32.mrf.mxu0
      %v306 = vadd.f32 %v219, %v305
      %v307 = vpop.f32.mrf.mxu0
      %308 = vmatprep.mubr.bf16.mxu0 0
      %309 = vmatmul.mubr.bf16.gmra.mxu0 %v193
      %v310 = vpop.f32.mrf.mxu0
      %v311 = vadd.f32 %v219, %v310
      %v312 = vpop.f32.mrf.mxu0
      %v313 = vpop.f32.mrf.mxu0
      %v314 = vadd.f32 %v219, %v313
      %v315 = vpop.f32.mrf.mxu0
      %316 = vmatprep.mubr.bf16.mxu0 0
      %317 = vmatmul.mubr.bf16.gmra.mxu0 %v194
      %v318 = vpop.f32.mrf.mxu0
      %v319 = vadd.f32 %v219, %v318
      %v320 = vpop.f32.mrf.mxu0
      %v321 = vpop.f32.mrf.mxu0
      %v322 = vadd.f32 %v219, %v321
      %v323 = vpop.f32.mrf.mxu0
      %324 = vmatprep.mubr.bf16.mxu0 0
      %325 = vmatmul.mubr.bf16.gmra.mxu0 %v195
      %v326 = vpop.f32.mrf.mxu0
      %v327 = vadd.f32 %v219, %v326
      %v328 = vpop.f32.mrf.mxu0
      %v329 = vpop.f32.mrf.mxu0
      %v330 = vadd.f32 %v219, %v329
      %v331 = vpop.f32.mrf.mxu0
      %332 = vmatprep.mubr.bf16.mxu0 0
      %333 = vmatmul.mubr.bf16.gmra.mxu0 %v196
      %v334 = vpop.f32.mrf.mxu0
      %v335 = vadd.f32 %v219, %v334
      %v336 = vpop.f32.mrf.mxu0
      %v337 = vpop.f32.mrf.mxu0
      %v338 = vadd.f32 %v219, %v337
      %v339 = vpop.f32.mrf.mxu0
      %340 = vmatprep.mubr.bf16.mxu0 0
      %341 = vmatmul.mubr.bf16.gmra.mxu0 %v197
      %v342 = vpop.f32.mrf.mxu0
      %v343 = vadd.f32 %v219, %v342
      %v344 = vpop.f32.mrf.mxu0
      %v345 = vpop.f32.mrf.mxu0
      %v346 = vadd.f32 %v219, %v345
      %v347 = vpop.f32.mrf.mxu0
      %348 = vmatprep.mubr.bf16.mxu0 0
      %349 = vmatmul.mubr.bf16.gmra.mxu0 %v198
      %v350 = vpop.f32.mrf.mxu0
      %v351 = vadd.f32 %v219, %v350
      %v352 = vpop.f32.mrf.mxu0
      %v353 = vpop.f32.mrf.mxu0
      %v354 = vadd.f32 %v219, %v353
      %v355 = vpop.f32.mrf.mxu0
      %356 = vmatprep.mubr.bf16.mxu0 0
      %357 = vmatmul.mubr.bf16.gmra.mxu0 %v199
      %v358 = vpop.f32.mrf.mxu0
      %v359 = vadd.f32 %v219, %v358
      %v360 = vpop.f32.mrf.mxu0
      %v361 = vpop.f32.mrf.mxu0
      %v362 = vadd.f32 %v219, %v361
      %v363 = vpop.f32.mrf.mxu0
      %364 = vdwg.mxu0
      %v365 = vtanh.pop %v303
      %v366 = vtanh.pop %v306
      %v367 = vtanh.pop %v311
      %v368 = vtanh.pop %v314
      %v369 = vtanh.pop %v319
      %v370 = vtanh.pop %v322
      %v371 = vtanh.pop %v327
      %v372 = vtanh.pop %v330
      %v373 = vtanh.pop %v335
      %v374 = vtanh.pop %v338
      %v375 = vtanh.pop %v343
      %v376 = vtanh.pop %v346
      %v377 = vtanh.pop %v351
      %v378 = vtanh.pop %v354
      %v379 = vtanh.pop %v359
      %v380 = vtanh.pop %v362
      %v381 = vpack.c.bf16 %v366, %v365
      %v382 = vpack.c.bf16 %v368, %v367
      %v383 = vpack.c.bf16 %v370, %v369
      %v384 = vpack.c.bf16 %v372, %v371
      %v385 = vpack.c.bf16 %v374, %v373
      %v386 = vpack.c.bf16 %v376, %v375
      %v387 = vpack.c.bf16 %v378, %v377
      %v388 = vpack.c.bf16 %v380, %v379
      %s389 = scalar_lea.vmem %s1, 64
      %v390 = vld [vmem:[%s389] sm:$0xf]
      %v391 = vld [vmem:[%s389 + $0x4] sm:$0xf]
      %v392 = vld [vmem:[%s389 + $0x8] sm:$0xf]
      %v393 = vld [vmem:[%s389 + $0xc] sm:$0xf]
      %v394 = vld [vmem:[%s389 + $0x10] sm:$0xf]
      %v395 = vld [vmem:[%s389 + $0x14] sm:$0xf]
      %v396 = vld [vmem:[%s389 + $0x18] sm:$0xf]
      %v397 = vld [vmem:[%s389 + $0x1c] sm:$0xf]
      %v398 = vld [vmem:[%s389 + $0x20] sm:$0xf]
      %v399 = vld [vmem:[%s389 + $0x24] sm:$0xf]
      %v400 = vld [vmem:[%s389 + $0x28] sm:$0xf]
      %v401 = vld [vmem:[%s389 + $0x2c] sm:$0xf]
      %v402 = vld [vmem:[%s389 + $0x30] sm:$0xf]
      %v403 = vld [vmem:[%s389 + $0x34] sm:$0xf]
      %v404 = vld [vmem:[%s389 + $0x38] sm:$0xf]
      %v405 = vld [vmem:[%s389 + $0x3c] sm:$0xf]
      %v406 = vlaneseq
      %v407 = vshrl.u32 %v406, 7
      %v408 = vsub.s32 1, %v407
      %v409 = vrot.slane %v191, %v408
      %v426 = vunpack.c.l.b16 %v390
      %v427 = vunpack.c.l.b16 %v391
      %v428 = vunpack.c.l.b16 %v392
      %v429 = vunpack.c.l.b16 %v393
      %v430 = vunpack.c.l.b16 %v394
      %v431 = vunpack.c.l.b16 %v395
      %v432 = vunpack.c.l.b16 %v396
      %v433 = vunpack.c.l.b16 %v397
      %v434 = vunpack.c.l.b16 %v398
      %v435 = vunpack.c.l.b16 %v399
      %v436 = vunpack.c.l.b16 %v400
      %v437 = vunpack.c.l.b16 %v401
      %v438 = vunpack.c.l.b16 %v402
      %v439 = vunpack.c.l.b16 %v403
      %v440 = vunpack.c.l.b16 %v404
      %v441 = vunpack.c.l.b16 %v405
      %v442 = vpack.c.b16 %v427, %v426
      %v443 = vpack.c.b16 %v429, %v428
      %v444 = vpack.c.b16 %v431, %v430
      %v445 = vpack.c.b16 %v433, %v432
      %v446 = vpack.c.b16 %v435, %v434
      %v447 = vpack.c.b16 %v437, %v436
      %v448 = vpack.c.b16 %v439, %v438
      %v449 = vpack.c.b16 %v441, %v440
      %458 = vmatprep.subr.bf16.mxu0 0
      %459 = vmatpush1.bf16.msra.mxu0 %v449
      %460 = vmatprep.subr.bf16.mxu0 0
      %461 = vmatpush1.bf16.msra.mxu0 %v448
      %462 = vmatprep.subr.bf16.mxu0 0
      %463 = vmatpush1.bf16.msra.mxu0 %v447
      %464 = vmatprep.subr.bf16.mxu0 0
      %465 = vmatpush1.bf16.msra.mxu0 %v446
      %466 = vmatprep.subr.bf16.mxu0 0
      %467 = vmatpush1.bf16.msra.mxu0 %v445
      %468 = vmatprep.subr.bf16.mxu0 0
      %469 = vmatpush1.bf16.msra.mxu0 %v444
      %470 = vmatprep.subr.bf16.mxu0 0
      %471 = vmatpush1.bf16.msra.mxu0 %v443
      %472 = vmatprep.subr.bf16.mxu0 0
      %473 = vmatpush1.bf16.msra.mxu0 %v442
      %474 = vmatprep.subr.bf16.mxu0 0
      %475 = vmatpush2.bf16.msra.mxu0 0
      %476 = vmatprep.subr.bf16.mxu0 0
      %477 = vmatpush2.bf16.msra.mxu0 0
      %478 = vmatprep.subr.bf16.mxu0 0
      %479 = vmatpush2.bf16.msra.mxu0 0
      %480 = vmatprep.subr.bf16.mxu0 0
      %481 = vmatpush2.bf16.msra.mxu0 0
      %482 = vmatprep.subr.bf16.mxu0 0
      %483 = vmatpush2.bf16.msra.mxu0 0
      %484 = vmatprep.subr.bf16.mxu0 0
      %485 = vmatpush2.bf16.msra.mxu0 0
      %486 = vmatprep.subr.bf16.mxu0 0
      %487 = vmatpush2.bf16.msra.mxu0 0
      %488 = vmatprep.subr.bf16.mxu0 0
      %489 = vmatpush2.bf16.msra.mxu0 0
      %490 = vmatprep.mubr.bf16.mxu0 0
      %491 = vmatmul.mubr.bf16.gmra.mxu0 %v381
      %v492 = vpop.f32.mrf.mxu0
      %v493 = vadd.f32 %v409, %v492
      %v494 = vpop.f32.mrf.mxu0
      %v495 = vpop.f32.mrf.mxu0
      %v496 = vadd.f32 %v409, %v495
      %v497 = vpop.f32.mrf.mxu0
      %498 = vmatprep.mubr.bf16.mxu0 0
      %499 = vmatmul.mubr.bf16.gmra.mxu0 %v382
      %v500 = vpop.f32.mrf.mxu0
      %v501 = vadd.f32 %v409, %v500
      %v502 = vpop.f32.mrf.mxu0
      %v503 = vpop.f32.mrf.mxu0
      %v504 = vadd.f32 %v409, %v503
      %v505 = vpop.f32.mrf.mxu0
      %506 = vmatprep.mubr.bf16.mxu0 0
      %507 = vmatmul.mubr.bf16.gmra.mxu0 %v383
      %v508 = vpop.f32.mrf.mxu0
      %v509 = vadd.f32 %v409, %v508
      %v510 = vpop.f32.mrf.mxu0
      %v511 = vpop.f32.mrf.mxu0
      %v512 = vadd.f32 %v409, %v511
      %v513 = vpop.f32.mrf.mxu0
      %514 = vmatprep.mubr.bf16.mxu0 0
      %515 = vmatmul.mubr.bf16.gmra.mxu0 %v384
      %v516 = vpop.f32.mrf.mxu0
      %v517 = vadd.f32 %v409, %v516
      %v518 = vpop.f32.mrf.mxu0
      %v519 = vpop.f32.mrf.mxu0
      %v520 = vadd.f32 %v409, %v519
      %v521 = vpop.f32.mrf.mxu0
      %522 = vmatprep.mubr.bf16.mxu0 0
      %523 = vmatmul.mubr.bf16.gmra.mxu0 %v385
      %v524 = vpop.f32.mrf.mxu0
      %v525 = vadd.f32 %v409, %v524
      %v526 = vpop.f32.mrf.mxu0
      %v527 = vpop.f32.mrf.mxu0
      %v528 = vadd.f32 %v409, %v527
      %v529 = vpop.f32.mrf.mxu0
      %530 = vmatprep.mubr.bf16.mxu0 0
      %531 = vmatmul.mubr.bf16.gmra.mxu0 %v386
      %v532 = vpop.f32.mrf.mxu0
      %v533 = vadd.f32 %v409, %v532
      %v534 = vpop.f32.mrf.mxu0
      %v535 = vpop.f32.mrf.mxu0
      %v536 = vadd.f32 %v409, %v535
      %v537 = vpop.f32.mrf.mxu0
      %538 = vmatprep.mubr.bf16.mxu0 0
      %539 = vmatmul.mubr.bf16.gmra.mxu0 %v387
      %v540 = vpop.f32.mrf.mxu0
      %v541 = vadd.f32 %v409, %v540
      %v542 = vpop.f32.mrf.mxu0
      %v543 = vpop.f32.mrf.mxu0
      %v544 = vadd.f32 %v409, %v543
      %v545 = vpop.f32.mrf.mxu0
      %546 = vmatprep.mubr.bf16.mxu0 0
      %547 = vmatmul.mubr.bf16.gmra.mxu0 %v388
      %v548 = vpop.f32.mrf.mxu0
      %v549 = vadd.f32 %v409, %v548
      %v550 = vpop.f32.mrf.mxu0
      %v551 = vpop.f32.mrf.mxu0
      %v552 = vadd.f32 %v409, %v551
      %v553 = vpop.f32.mrf.mxu0
      %554 = vdwg.mxu0
      %v555 = vtanh.pop %v493
      %v556 = vtanh.pop %v496
      %v557 = vtanh.pop %v501
      %v558 = vtanh.pop %v504
      %v559 = vtanh.pop %v509
      %v560 = vtanh.pop %v512
      %v561 = vtanh.pop %v517
      %v562 = vtanh.pop %v520
      %v563 = vtanh.pop %v525
      %v564 = vtanh.pop %v528
      %v565 = vtanh.pop %v533
      %v566 = vtanh.pop %v536
      %v567 = vtanh.pop %v541
      %v568 = vtanh.pop %v544
      %v569 = vtanh.pop %v549
      %v570 = vtanh.pop %v552
      %v571 = vpack.c.bf16 %v556, %v555
      %v572 = vpack.c.bf16 %v558, %v557
      %v573 = vpack.c.bf16 %v560, %v559
      %v574 = vpack.c.bf16 %v562, %v561
      %v575 = vpack.c.bf16 %v564, %v563
      %v576 = vpack.c.bf16 %v566, %v565
      %v577 = vpack.c.bf16 %v568, %v567
      %v578 = vpack.c.bf16 %v570, %v569
      %s579 = scalar_lea.vmem %s1, 128
      %v580 = vld [vmem:[%s579] sm:$0xf]
      %v581 = vld [vmem:[%s579 + $0x4] sm:$0xf]
      %v582 = vld [vmem:[%s579 + $0x8] sm:$0xf]
      %v583 = vld [vmem:[%s579 + $0xc] sm:$0xf]
      %v584 = vld [vmem:[%s579 + $0x10] sm:$0xf]
      %v585 = vld [vmem:[%s579 + $0x14] sm:$0xf]
      %v586 = vld [vmem:[%s579 + $0x18] sm:$0xf]
      %v587 = vld [vmem:[%s579 + $0x1c] sm:$0xf]
      %v588 = vld [vmem:[%s579 + $0x20] sm:$0xf]
      %v589 = vld [vmem:[%s579 + $0x24] sm:$0xf]
      %v590 = vld [vmem:[%s579 + $0x28] sm:$0xf]
      %v591 = vld [vmem:[%s579 + $0x2c] sm:$0xf]
      %v592 = vld [vmem:[%s579 + $0x30] sm:$0xf]
      %v593 = vld [vmem:[%s579 + $0x34] sm:$0xf]
      %v594 = vld [vmem:[%s579 + $0x38] sm:$0xf]
      %v595 = vld [vmem:[%s579 + $0x3c] sm:$0xf]
      %v596 = vlaneseq
      %v597 = vshrl.u32 %v596, 7
      %v598 = vsub.s32 2, %v597
      %v599 = vrot.slane %v191, %v598
      %v616 = vunpack.c.l.b16 %v580
      %v617 = vunpack.c.l.b16 %v581
      %v618 = vunpack.c.l.b16 %v582
      %v619 = vunpack.c.l.b16 %v583
      %v620 = vunpack.c.l.b16 %v584
      %v621 = vunpack.c.l.b16 %v585
      %v622 = vunpack.c.l.b16 %v586
      %v623 = vunpack.c.l.b16 %v587
      %v624 = vunpack.c.l.b16 %v588
      %v625 = vunpack.c.l.b16 %v589
      %v626 = vunpack.c.l.b16 %v590
      %v627 = vunpack.c.l.b16 %v591
      %v628 = vunpack.c.l.b16 %v592
      %v629 = vunpack.c.l.b16 %v593
      %v630 = vunpack.c.l.b16 %v594
      %v631 = vunpack.c.l.b16 %v595
      %v632 = vpack.c.b16 %v617, %v616
      %v633 = vpack.c.b16 %v619, %v618
      %v634 = vpack.c.b16 %v621, %v620
      %v635 = vpack.c.b16 %v623, %v622
      %v636 = vpack.c.b16 %v625, %v624
      %v637 = vpack.c.b16 %v627, %v626
      %v638 = vpack.c.b16 %v629, %v628
      %v639 = vpack.c.b16 %v631, %v630
      %648 = vmatprep.subr.bf16.mxu0 0
      %649 = vmatpush1.bf16.msra.mxu0 %v639
      %650 = vmatprep.subr.bf16.mxu0 0
      %651 = vmatpush1.bf16.msra.mxu0 %v638
      %652 = vmatprep.subr.bf16.mxu0 0
      %653 = vmatpush1.bf16.msra.mxu0 %v637
      %654 = vmatprep.subr.bf16.mxu0 0
      %655 = vmatpush1.bf16.msra.mxu0 %v636
      %656 = vmatprep.subr.bf16.mxu0 0
      %657 = vmatpush1.bf16.msra.mxu0 %v635
      %658 = vmatprep.subr.bf16.mxu0 0
      %659 = vmatpush1.bf16.msra.mxu0 %v634
      %660 = vmatprep.subr.bf16.mxu0 0
      %661 = vmatpush1.bf16.msra.mxu0 %v633
      %662 = vmatprep.subr.bf16.mxu0 0
      %663 = vmatpush1.bf16.msra.mxu0 %v632
      %664 = vmatprep.subr.bf16.mxu0 0
      %665 = vmatpush2.bf16.msra.mxu0 0
      %666 = vmatprep.subr.bf16.mxu0 0
      %667 = vmatpush2.bf16.msra.mxu0 0
      %668 = vmatprep.subr.bf16.mxu0 0
      %669 = vmatpush2.bf16.msra.mxu0 0
      %670 = vmatprep.subr.bf16.mxu0 0
      %671 = vmatpush2.bf16.msra.mxu0 0
      %672 = vmatprep.subr.bf16.mxu0 0
      %673 = vmatpush2.bf16.msra.mxu0 0
      %674 = vmatprep.subr.bf16.mxu0 0
      %675 = vmatpush2.bf16.msra.mxu0 0
      %676 = vmatprep.subr.bf16.mxu0 0
      %677 = vmatpush2.bf16.msra.mxu0 0
      %678 = vmatprep.subr.bf16.mxu0 0
      %679 = vmatpush2.bf16.msra.mxu0 0
      %680 = vmatprep.mubr.bf16.mxu0 0
      %681 = vmatmul.mubr.bf16.gmra.mxu0 %v571
      %v682 = vpop.f32.mrf.mxu0
      %v683 = vadd.f32 %v599, %v682
      %v684 = vpop.f32.mrf.mxu0
      %v685 = vpop.f32.mrf.mxu0
      %v686 = vadd.f32 %v599, %v685
      %v687 = vpop.f32.mrf.mxu0
      %688 = vmatprep.mubr.bf16.mxu0 0
      %689 = vmatmul.mubr.bf16.gmra.mxu0 %v572
      %v690 = vpop.f32.mrf.mxu0
      %v691 = vadd.f32 %v599, %v690
      %v692 = vpop.f32.mrf.mxu0
      %v693 = vpop.f32.mrf.mxu0
      %v694 = vadd.f32 %v599, %v693
      %v695 = vpop.f32.mrf.mxu0
      %696 = vmatprep.mubr.bf16.mxu0 0
      %697 = vmatmul.mubr.bf16.gmra.mxu0 %v573
      %v698 = vpop.f32.mrf.mxu0
      %v699 = vadd.f32 %v599, %v698
      %v700 = vpop.f32.mrf.mxu0
      %v701 = vpop.f32.mrf.mxu0
      %v702 = vadd.f32 %v599, %v701
      %v703 = vpop.f32.mrf.mxu0
      %704 = vmatprep.mubr.bf16.mxu0 0
      %705 = vmatmul.mubr.bf16.gmra.mxu0 %v574
      %v706 = vpop.f32.mrf.mxu0
      %v707 = vadd.f32 %v599, %v706
      %v708 = vpop.f32.mrf.mxu0
      %v709 = vpop.f32.mrf.mxu0
      %v710 = vadd.f32 %v599, %v709
      %v711 = vpop.f32.mrf.mxu0
      %712 = vmatprep.mubr.bf16.mxu0 0
      %713 = vmatmul.mubr.bf16.gmra.mxu0 %v575
      %v714 = vpop.f32.mrf.mxu0
      %v715 = vadd.f32 %v599, %v714
      %v716 = vpop.f32.mrf.mxu0
      %v717 = vpop.f32.mrf.mxu0
      %v718 = vadd.f32 %v599, %v717
      %v719 = vpop.f32.mrf.mxu0
      %720 = vmatprep.mubr.bf16.mxu0 0
      %721 = vmatmul.mubr.bf16.gmra.mxu0 %v576
      %v722 = vpop.f32.mrf.mxu0
      %v723 = vadd.f32 %v599, %v722
      %v724 = vpop.f32.mrf.mxu0
      %v725 = vpop.f32.mrf.mxu0
      %v726 = vadd.f32 %v599, %v725
      %v727 = vpop.f32.mrf.mxu0
      %728 = vmatprep.mubr.bf16.mxu0 0
      %729 = vmatmul.mubr.bf16.gmra.mxu0 %v577
      %v730 = vpop.f32.mrf.mxu0
      %v731 = vadd.f32 %v599, %v730
      %v732 = vpop.f32.mrf.mxu0
      %v733 = vpop.f32.mrf.mxu0
      %v734 = vadd.f32 %v599, %v733
      %v735 = vpop.f32.mrf.mxu0
      %736 = vmatprep.mubr.bf16.mxu0 0
      %737 = vmatmul.mubr.bf16.gmra.mxu0 %v578
      %v738 = vpop.f32.mrf.mxu0
      %v739 = vadd.f32 %v599, %v738
      %v740 = vpop.f32.mrf.mxu0
      %v741 = vpop.f32.mrf.mxu0
      %v742 = vadd.f32 %v599, %v741
      %v743 = vpop.f32.mrf.mxu0
      %744 = vdwg.mxu0
      %v745 = vtanh.pop %v683
      %v746 = vtanh.pop %v686
      %v747 = vtanh.pop %v691
      %v748 = vtanh.pop %v694
      %v749 = vtanh.pop %v699
      %v750 = vtanh.pop %v702
      %v751 = vtanh.pop %v707
      %v752 = vtanh.pop %v710
      %v753 = vtanh.pop %v715
      %v754 = vtanh.pop %v718
      %v755 = vtanh.pop %v723
      %v756 = vtanh.pop %v726
      %v757 = vtanh.pop %v731
      %v758 = vtanh.pop %v734
      %v759 = vtanh.pop %v739
      %v760 = vtanh.pop %v742
      %v761 = vpack.c.bf16 %v746, %v745
      %v762 = vpack.c.bf16 %v748, %v747
      %v763 = vpack.c.bf16 %v750, %v749
      %v764 = vpack.c.bf16 %v752, %v751
      %v765 = vpack.c.bf16 %v754, %v753
      %v766 = vpack.c.bf16 %v756, %v755
      %v767 = vpack.c.bf16 %v758, %v757
      %v768 = vpack.c.bf16 %v760, %v759
      %s769 = scalar_lea.vmem %s1, 192
      %v770 = vld [vmem:[%s769] sm:$0xf]
      %v771 = vld [vmem:[%s769 + $0x4] sm:$0xf]
      %v772 = vld [vmem:[%s769 + $0x8] sm:$0xf]
      %v773 = vld [vmem:[%s769 + $0xc] sm:$0xf]
      %v774 = vld [vmem:[%s769 + $0x10] sm:$0xf]
      %v775 = vld [vmem:[%s769 + $0x14] sm:$0xf]
      %v776 = vld [vmem:[%s769 + $0x18] sm:$0xf]
      %v777 = vld [vmem:[%s769 + $0x1c] sm:$0xf]
      %v778 = vld [vmem:[%s769 + $0x20] sm:$0xf]
      %v779 = vld [vmem:[%s769 + $0x24] sm:$0xf]
      %v780 = vld [vmem:[%s769 + $0x28] sm:$0xf]
      %v781 = vld [vmem:[%s769 + $0x2c] sm:$0xf]
      %v782 = vld [vmem:[%s769 + $0x30] sm:$0xf]
      %v783 = vld [vmem:[%s769 + $0x34] sm:$0xf]
      %v784 = vld [vmem:[%s769 + $0x38] sm:$0xf]
      %v785 = vld [vmem:[%s769 + $0x3c] sm:$0xf]
      %v802 = vunpack.c.l.b16 %v770
      %v803 = vunpack.c.l.b16 %v771
      %v804 = vunpack.c.l.b16 %v772
      %v805 = vunpack.c.l.b16 %v773
      %v806 = vunpack.c.l.b16 %v774
      %v807 = vunpack.c.l.b16 %v775
      %v808 = vunpack.c.l.b16 %v776
      %v809 = vunpack.c.l.b16 %v777
      %v810 = vunpack.c.l.b16 %v778
      %v811 = vunpack.c.l.b16 %v779
      %v812 = vunpack.c.l.b16 %v780
      %v813 = vunpack.c.l.b16 %v781
      %v814 = vunpack.c.l.b16 %v782
      %v815 = vunpack.c.l.b16 %v783
      %v816 = vunpack.c.l.b16 %v784
      %v817 = vunpack.c.l.b16 %v785
      %v818 = vpack.c.b16 %v803, %v802
      %v819 = vpack.c.b16 %v805, %v804
      %v820 = vpack.c.b16 %v807, %v806
      %v821 = vpack.c.b16 %v809, %v808
      %v822 = vpack.c.b16 %v811, %v810
      %v823 = vpack.c.b16 %v813, %v812
      %v824 = vpack.c.b16 %v815, %v814
      %v825 = vpack.c.b16 %v817, %v816
      %834 = vmatprep.subr.bf16.mxu0 0
      %835 = vmatpush1.bf16.msra.mxu0 %v825
      %836 = vmatprep.subr.bf16.mxu0 0
      %837 = vmatpush1.bf16.msra.mxu0 %v824
      %838 = vmatprep.subr.bf16.mxu0 0
      %839 = vmatpush1.bf16.msra.mxu0 %v823
      %840 = vmatprep.subr.bf16.mxu0 0
      %841 = vmatpush1.bf16.msra.mxu0 %v822
      %842 = vmatprep.subr.bf16.mxu0 0
      %843 = vmatpush1.bf16.msra.mxu0 %v821
      %844 = vmatprep.subr.bf16.mxu0 0
      %845 = vmatpush1.bf16.msra.mxu0 %v820
      %846 = vmatprep.subr.bf16.mxu0 0
      %847 = vmatpush1.bf16.msra.mxu0 %v819
      %848 = vmatprep.subr.bf16.mxu0 0
      %849 = vmatpush1.bf16.msra.mxu0 %v818
      %850 = vmatprep.subr.bf16.mxu0 0
      %851 = vmatpush2.bf16.msra.mxu0 0
      %852 = vmatprep.subr.bf16.mxu0 0
      %853 = vmatpush2.bf16.msra.mxu0 0
      %854 = vmatprep.subr.bf16.mxu0 0
      %855 = vmatpush2.bf16.msra.mxu0 0
      %856 = vmatprep.subr.bf16.mxu0 0
      %857 = vmatpush2.bf16.msra.mxu0 0
      %858 = vmatprep.subr.bf16.mxu0 0
      %859 = vmatpush2.bf16.msra.mxu0 0
      %860 = vmatprep.subr.bf16.mxu0 0
      %861 = vmatpush2.bf16.msra.mxu0 0
      %862 = vmatprep.subr.bf16.mxu0 0
      %863 = vmatpush2.bf16.msra.mxu0 0
      %864 = vmatprep.subr.bf16.mxu0 0
      %865 = vmatpush2.bf16.msra.mxu0 0
      %866 = vmatprep.mubr.bf16.mxu0 0
      %867 = vmatmul.mubr.bf16.gmra.mxu0 %v761
      %v868 = vpop.f32.mrf.mxu0
      %v869 = vadd.f32 0.0, %v868
      %v870 = vpop.f32.mrf.mxu0
      %v871 = vpop.f32.mrf.mxu0
      %v872 = vadd.f32 0.0, %v871
      %v873 = vpop.f32.mrf.mxu0
      %874 = vmatprep.mubr.bf16.mxu0 0
      %875 = vmatmul.mubr.bf16.gmra.mxu0 %v762
      %v876 = vpop.f32.mrf.mxu0
      %v877 = vadd.f32 0.0, %v876
      %v878 = vpop.f32.mrf.mxu0
      %v879 = vpop.f32.mrf.mxu0
      %v880 = vadd.f32 0.0, %v879
      %v881 = vpop.f32.mrf.mxu0
      %882 = vmatprep.mubr.bf16.mxu0 0
      %883 = vmatmul.mubr.bf16.gmra.mxu0 %v763
      %v884 = vpop.f32.mrf.mxu0
      %v885 = vadd.f32 0.0, %v884
      %v886 = vpop.f32.mrf.mxu0
      %v887 = vpop.f32.mrf.mxu0
      %v888 = vadd.f32 0.0, %v887
      %v889 = vpop.f32.mrf.mxu0
      %890 = vmatprep.mubr.bf16.mxu0 0
      %891 = vmatmul.mubr.bf16.gmra.mxu0 %v764
      %v892 = vpop.f32.mrf.mxu0
      %v893 = vadd.f32 0.0, %v892
      %v894 = vpop.f32.mrf.mxu0
      %v895 = vpop.f32.mrf.mxu0
      %v896 = vadd.f32 0.0, %v895
      %v897 = vpop.f32.mrf.mxu0
      %898 = vmatprep.mubr.bf16.mxu0 0
      %899 = vmatmul.mubr.bf16.gmra.mxu0 %v765
      %v900 = vpop.f32.mrf.mxu0
      %v901 = vadd.f32 0.0, %v900
      %v902 = vpop.f32.mrf.mxu0
      %v903 = vpop.f32.mrf.mxu0
      %v904 = vadd.f32 0.0, %v903
      %v905 = vpop.f32.mrf.mxu0
      %906 = vmatprep.mubr.bf16.mxu0 0
      %907 = vmatmul.mubr.bf16.gmra.mxu0 %v766
      %v908 = vpop.f32.mrf.mxu0
      %v909 = vadd.f32 0.0, %v908
      %v910 = vpop.f32.mrf.mxu0
      %v911 = vpop.f32.mrf.mxu0
      %v912 = vadd.f32 0.0, %v911
      %v913 = vpop.f32.mrf.mxu0
      %914 = vmatprep.mubr.bf16.mxu0 0
      %915 = vmatmul.mubr.bf16.gmra.mxu0 %v767
      %v916 = vpop.f32.mrf.mxu0
      %v917 = vadd.f32 0.0, %v916
      %v918 = vpop.f32.mrf.mxu0
      %v919 = vpop.f32.mrf.mxu0
      %v920 = vadd.f32 0.0, %v919
      %v921 = vpop.f32.mrf.mxu0
      %922 = vmatprep.mubr.bf16.mxu0 0
      %923 = vmatmul.mubr.bf16.gmra.mxu0 %v768
      %v924 = vpop.f32.mrf.mxu0
      %v925 = vadd.f32 0.0, %v924
      %v926 = vpop.f32.mrf.mxu0
      %v927 = vpop.f32.mrf.mxu0
      %v928 = vadd.f32 0.0, %v927
      %v929 = vpop.f32.mrf.mxu0
      %930 = vdwg.mxu0
      %v931 = vmul.f32 %v175, %v869
      %v932 = vmul.f32 %v176, %v872
      %v933 = vmul.f32 %v177, %v877
      %v934 = vmul.f32 %v178, %v880
      %v935 = vmul.f32 %v179, %v885
      %v936 = vmul.f32 %v180, %v888
      %v937 = vmul.f32 %v181, %v893
      %v938 = vmul.f32 %v182, %v896
      %v939 = vmul.f32 %v183, %v901
      %v940 = vmul.f32 %v184, %v904
      %v941 = vmul.f32 %v185, %v909
      %v942 = vmul.f32 %v186, %v912
      %v943 = vmul.f32 %v187, %v917
      %v944 = vmul.f32 %v188, %v920
      %v945 = vmul.f32 %v189, %v925
      %v946 = vmul.f32 %v190, %v928
      %947 = vrot.lane.b32.xlu0 %v931, 120
      %v948 = vpop.permute.xlu0 %947
      %949 = vrot.lane.b32.xlu0 %v932, 120
      %v950 = vpop.permute.xlu0 %949
      %951 = vrot.lane.b32.xlu0 %v933, 120
      %v952 = vpop.permute.xlu0 %951
      %953 = vrot.lane.b32.xlu0 %v934, 120
      %v954 = vpop.permute.xlu0 %953
      %955 = vrot.lane.b32.xlu0 %v935, 120
      %v956 = vpop.permute.xlu0 %955
      %957 = vrot.lane.b32.xlu0 %v936, 120
      %v958 = vpop.permute.xlu0 %957
      %959 = vrot.lane.b32.xlu0 %v937, 120
      %v960 = vpop.permute.xlu0 %959
      %961 = vrot.lane.b32.xlu0 %v938, 120
      %v962 = vpop.permute.xlu0 %961
      %963 = vrot.lane.b32.xlu0 %v939, 120
      %v964 = vpop.permute.xlu0 %963
      %965 = vrot.lane.b32.xlu0 %v940, 120
      %v966 = vpop.permute.xlu0 %965
      %967 = vrot.lane.b32.xlu0 %v941, 120
      %v968 = vpop.permute.xlu0 %967
      %969 = vrot.lane.b32.xlu0 %v942, 120
      %v970 = vpop.permute.xlu0 %969
      %971 = vrot.lane.b32.xlu0 %v943, 120
      %v972 = vpop.permute.xlu0 %971
      %973 = vrot.lane.b32.xlu0 %v944, 120
      %v974 = vpop.permute.xlu0 %973
      %975 = vrot.lane.b32.xlu0 %v945, 120
      %v976 = vpop.permute.xlu0 %975
      %977 = vrot.lane.b32.xlu0 %v946, 120
      %v978 = vpop.permute.xlu0 %977
      %v979 = vadd.f32 %v869, %v948
      %v980 = vadd.f32 %v872, %v950
      %v981 = vadd.f32 %v877, %v952
      %v982 = vadd.f32 %v880, %v954
      %v983 = vadd.f32 %v885, %v956
      %v984 = vadd.f32 %v888, %v958
      %v985 = vadd.f32 %v893, %v960
      %v986 = vadd.f32 %v896, %v962
      %v987 = vadd.f32 %v901, %v964
      %v988 = vadd.f32 %v904, %v966
      %v989 = vadd.f32 %v909, %v968
      %v990 = vadd.f32 %v912, %v970
      %v991 = vadd.f32 %v917, %v972
      %v992 = vadd.f32 %v920, %v974
      %v993 = vadd.f32 %v925, %v976
      %v994 = vadd.f32 %v928, %v978
      %995 = vrot.lane.b32.xlu0 %v931, 112
      %v996 = vpop.permute.xlu0 %995
      %997 = vrot.lane.b32.xlu0 %v932, 112
      %v998 = vpop.permute.xlu0 %997
      %999 = vrot.lane.b32.xlu0 %v933, 112
      %v1000 = vpop.permute.xlu0 %999
      %1001 = vrot.lane.b32.xlu0 %v934, 112
      %v1002 = vpop.permute.xlu0 %1001
      %1003 = vrot.lane.b32.xlu0 %v935, 112
      %v1004 = vpop.permute.xlu0 %1003
      %1005 = vrot.lane.b32.xlu0 %v936, 112
      %v1006 = vpop.permute.xlu0 %1005
      %1007 = vrot.lane.b32.xlu0 %v937, 112
      %v1008 = vpop.permute.xlu0 %1007
      %1009 = vrot.lane.b32.xlu0 %v938, 112
      %v1010 = vpop.permute.xlu0 %1009
      %1011 = vrot.lane.b32.xlu0 %v939, 112
      %v1012 = vpop.permute.xlu0 %1011
      %1013 = vrot.lane.b32.xlu0 %v940, 112
      %v1014 = vpop.permute.xlu0 %1013
      %1015 = vrot.lane.b32.xlu0 %v941, 112
      %v1016 = vpop.permute.xlu0 %1015
      %1017 = vrot.lane.b32.xlu0 %v942, 112
      %v1018 = vpop.permute.xlu0 %1017
      %1019 = vrot.lane.b32.xlu0 %v943, 112
      %v1020 = vpop.permute.xlu0 %1019
      %1021 = vrot.lane.b32.xlu0 %v944, 112
      %v1022 = vpop.permute.xlu0 %1021
      %1023 = vrot.lane.b32.xlu0 %v945, 112
      %v1024 = vpop.permute.xlu0 %1023
      %1025 = vrot.lane.b32.xlu0 %v946, 112
      %v1026 = vpop.permute.xlu0 %1025
      %v1027 = vadd.f32 %v979, %v996
      %v1028 = vadd.f32 %v980, %v998
      %v1029 = vadd.f32 %v981, %v1000
      %v1030 = vadd.f32 %v982, %v1002
      %v1031 = vadd.f32 %v983, %v1004
      %v1032 = vadd.f32 %v984, %v1006
      %v1033 = vadd.f32 %v985, %v1008
      %v1034 = vadd.f32 %v986, %v1010
      %v1035 = vadd.f32 %v987, %v1012
      %v1036 = vadd.f32 %v988, %v1014
      %v1037 = vadd.f32 %v989, %v1016
      %v1038 = vadd.f32 %v990, %v1018
      %v1039 = vadd.f32 %v991, %v1020
      %v1040 = vadd.f32 %v992, %v1022
      %v1041 = vadd.f32 %v993, %v1024
      %v1042 = vadd.f32 %v994, %v1026
      %v1043 = vpack.c.bf16 %v1028, %v1027
      %v1044 = vpack.c.bf16 %v1030, %v1029
      %v1045 = vpack.c.bf16 %v1032, %v1031
      %v1046 = vpack.c.bf16 %v1034, %v1033
      %v1047 = vpack.c.bf16 %v1036, %v1035
      %v1048 = vpack.c.bf16 %v1038, %v1037
      %v1049 = vpack.c.bf16 %v1040, %v1039
      %v1050 = vpack.c.bf16 %v1042, %v1041
      %s1051 = scalar_lea.vmem %s1, 256
      %v1052 = vld [vmem:[%s1051] sm:$0xf]
      %v1053 = vld [vmem:[%s1051 + $0x4] sm:$0xf]
      %v1054 = vld [vmem:[%s1051 + $0x8] sm:$0xf]
      %v1055 = vld [vmem:[%s1051 + $0xc] sm:$0xf]
      %v1056 = vld [vmem:[%s1051 + $0x10] sm:$0xf]
      %v1057 = vld [vmem:[%s1051 + $0x14] sm:$0xf]
      %v1058 = vld [vmem:[%s1051 + $0x18] sm:$0xf]
      %v1059 = vld [vmem:[%s1051 + $0x1c] sm:$0xf]
      %v1060 = vld [vmem:[%s1051 + $0x20] sm:$0xf]
      %v1061 = vld [vmem:[%s1051 + $0x24] sm:$0xf]
      %v1062 = vld [vmem:[%s1051 + $0x28] sm:$0xf]
      %v1063 = vld [vmem:[%s1051 + $0x2c] sm:$0xf]
      %v1064 = vld [vmem:[%s1051 + $0x30] sm:$0xf]
      %v1065 = vld [vmem:[%s1051 + $0x34] sm:$0xf]
      %v1066 = vld [vmem:[%s1051 + $0x38] sm:$0xf]
      %v1067 = vld [vmem:[%s1051 + $0x3c] sm:$0xf]
      %v1068 = vlaneseq
      %v1069 = vshrl.u32 %v1068, 7
      %v1070 = vsub.s32 3, %v1069
      %v1071 = vrot.slane %v191, %v1070
      %v1088 = vunpack.c.l.b16 %v1052
      %v1089 = vunpack.c.l.b16 %v1053
      %v1090 = vunpack.c.l.b16 %v1054
      %v1091 = vunpack.c.l.b16 %v1055
      %v1092 = vunpack.c.l.b16 %v1056
      %v1093 = vunpack.c.l.b16 %v1057
      %v1094 = vunpack.c.l.b16 %v1058
      %v1095 = vunpack.c.l.b16 %v1059
      %v1096 = vunpack.c.l.b16 %v1060
      %v1097 = vunpack.c.l.b16 %v1061
      %v1098 = vunpack.c.l.b16 %v1062
      %v1099 = vunpack.c.l.b16 %v1063
      %v1100 = vunpack.c.l.b16 %v1064
      %v1101 = vunpack.c.l.b16 %v1065
      %v1102 = vunpack.c.l.b16 %v1066
      %v1103 = vunpack.c.l.b16 %v1067
      %v1104 = vpack.c.b16 %v1089, %v1088
      %v1105 = vpack.c.b16 %v1091, %v1090
      %v1106 = vpack.c.b16 %v1093, %v1092
      %v1107 = vpack.c.b16 %v1095, %v1094
      %v1108 = vpack.c.b16 %v1097, %v1096
      %v1109 = vpack.c.b16 %v1099, %v1098
      %v1110 = vpack.c.b16 %v1101, %v1100
      %v1111 = vpack.c.b16 %v1103, %v1102
      %1120 = vmatprep.subr.bf16.mxu0 0
      %1121 = vmatpush1.bf16.msra.mxu0 %v1111
      %1122 = vmatprep.subr.bf16.mxu0 0
      %1123 = vmatpush1.bf16.msra.mxu0 %v1110
      %1124 = vmatprep.subr.bf16.mxu0 0
      %1125 = vmatpush1.bf16.msra.mxu0 %v1109
      %1126 = vmatprep.subr.bf16.mxu0 0
      %1127 = vmatpush1.bf16.msra.mxu0 %v1108
      %1128 = vmatprep.subr.bf16.mxu0 0
      %1129 = vmatpush1.bf16.msra.mxu0 %v1107
      %1130 = vmatprep.subr.bf16.mxu0 0
      %1131 = vmatpush1.bf16.msra.mxu0 %v1106
      %1132 = vmatprep.subr.bf16.mxu0 0
      %1133 = vmatpush1.bf16.msra.mxu0 %v1105
      %1134 = vmatprep.subr.bf16.mxu0 0
      %1135 = vmatpush1.bf16.msra.mxu0 %v1104
      %1136 = vmatprep.subr.bf16.mxu0 0
      %1137 = vmatpush2.bf16.msra.mxu0 0
      %1138 = vmatprep.subr.bf16.mxu0 0
      %1139 = vmatpush2.bf16.msra.mxu0 0
      %1140 = vmatprep.subr.bf16.mxu0 0
      %1141 = vmatpush2.bf16.msra.mxu0 0
      %1142 = vmatprep.subr.bf16.mxu0 0
      %1143 = vmatpush2.bf16.msra.mxu0 0
      %1144 = vmatprep.subr.bf16.mxu0 0
      %1145 = vmatpush2.bf16.msra.mxu0 0
      %1146 = vmatprep.subr.bf16.mxu0 0
      %1147 = vmatpush2.bf16.msra.mxu0 0
      %1148 = vmatprep.subr.bf16.mxu0 0
      %1149 = vmatpush2.bf16.msra.mxu0 0
      %1150 = vmatprep.subr.bf16.mxu0 0
      %1151 = vmatpush2.bf16.msra.mxu0 0
      %1152 = vmatprep.mubr.bf16.mxu0 0
      %1153 = vmatmul.mubr.bf16.gmra.mxu0 %v1043
      %v1154 = vpop.f32.mrf.mxu0
      %v1155 = vadd.f32 %v1071, %v1154
      %v1156 = vpop.f32.mrf.mxu0
      %v1157 = vpop.f32.mrf.mxu0
      %v1158 = vadd.f32 %v1071, %v1157
      %v1159 = vpop.f32.mrf.mxu0
      %1160 = vmatprep.mubr.bf16.mxu0 0
      %1161 = vmatmul.mubr.bf16.gmra.mxu0 %v1044
      %v1162 = vpop.f32.mrf.mxu0
      %v1163 = vadd.f32 %v1071, %v1162
      %v1164 = vpop.f32.mrf.mxu0
      %v1165 = vpop.f32.mrf.mxu0
      %v1166 = vadd.f32 %v1071, %v1165
      %v1167 = vpop.f32.mrf.mxu0
      %1168 = vmatprep.mubr.bf16.mxu0 0
      %1169 = vmatmul.mubr.bf16.gmra.mxu0 %v1045
      %v1170 = vpop.f32.mrf.mxu0
      %v1171 = vadd.f32 %v1071, %v1170
      %v1172 = vpop.f32.mrf.mxu0
      %v1173 = vpop.f32.mrf.mxu0
      %v1174 = vadd.f32 %v1071, %v1173
      %v1175 = vpop.f32.mrf.mxu0
      %1176 = vmatprep.mubr.bf16.mxu0 0
      %1177 = vmatmul.mubr.bf16.gmra.mxu0 %v1046
      %v1178 = vpop.f32.mrf.mxu0
      %v1179 = vadd.f32 %v1071, %v1178
      %v1180 = vpop.f32.mrf.mxu0
      %v1181 = vpop.f32.mrf.mxu0
      %v1182 = vadd.f32 %v1071, %v1181
      %v1183 = vpop.f32.mrf.mxu0
      %1184 = vmatprep.mubr.bf16.mxu0 0
      %1185 = vmatmul.mubr.bf16.gmra.mxu0 %v1047
      %v1186 = vpop.f32.mrf.mxu0
      %v1187 = vadd.f32 %v1071, %v1186
      %v1188 = vpop.f32.mrf.mxu0
      %v1189 = vpop.f32.mrf.mxu0
      %v1190 = vadd.f32 %v1071, %v1189
      %v1191 = vpop.f32.mrf.mxu0
      %1192 = vmatprep.mubr.bf16.mxu0 0
      %1193 = vmatmul.mubr.bf16.gmra.mxu0 %v1048
      %v1194 = vpop.f32.mrf.mxu0
      %v1195 = vadd.f32 %v1071, %v1194
      %v1196 = vpop.f32.mrf.mxu0
      %v1197 = vpop.f32.mrf.mxu0
      %v1198 = vadd.f32 %v1071, %v1197
      %v1199 = vpop.f32.mrf.mxu0
      %1200 = vmatprep.mubr.bf16.mxu0 0
      %1201 = vmatmul.mubr.bf16.gmra.mxu0 %v1049
      %v1202 = vpop.f32.mrf.mxu0
      %v1203 = vadd.f32 %v1071, %v1202
      %v1204 = vpop.f32.mrf.mxu0
      %v1205 = vpop.f32.mrf.mxu0
      %v1206 = vadd.f32 %v1071, %v1205
      %v1207 = vpop.f32.mrf.mxu0
      %1208 = vmatprep.mubr.bf16.mxu0 0
      %1209 = vmatmul.mubr.bf16.gmra.mxu0 %v1050
      %v1210 = vpop.f32.mrf.mxu0
      %v1211 = vadd.f32 %v1071, %v1210
      %v1212 = vpop.f32.mrf.mxu0
      %v1213 = vpop.f32.mrf.mxu0
      %v1214 = vadd.f32 %v1071, %v1213
      %v1215 = vpop.f32.mrf.mxu0
      %1216 = vdwg.mxu0
      %v1217 = vtanh.pop %v1155
      %v1218 = vtanh.pop %v1158
      %v1219 = vtanh.pop %v1163
      %v1220 = vtanh.pop %v1166
      %v1221 = vtanh.pop %v1171
      %v1222 = vtanh.pop %v1174
      %v1223 = vtanh.pop %v1179
      %v1224 = vtanh.pop %v1182
      %v1225 = vtanh.pop %v1187
      %v1226 = vtanh.pop %v1190
      %v1227 = vtanh.pop %v1195
      %v1228 = vtanh.pop %v1198
      %v1229 = vtanh.pop %v1203
      %v1230 = vtanh.pop %v1206
      %v1231 = vtanh.pop %v1211
      %v1232 = vtanh.pop %v1214
      %v1233 = vpack.c.bf16 %v1218, %v1217
      %v1234 = vpack.c.bf16 %v1220, %v1219
      %v1235 = vpack.c.bf16 %v1222, %v1221
      %v1236 = vpack.c.bf16 %v1224, %v1223
      %v1237 = vpack.c.bf16 %v1226, %v1225
      %v1238 = vpack.c.bf16 %v1228, %v1227
      %v1239 = vpack.c.bf16 %v1230, %v1229
      %v1240 = vpack.c.bf16 %v1232, %v1231
      %s1241 = scalar_lea.vmem %s1, 320
      %v1242 = vld [vmem:[%s1241] sm:$0xf]
      %v1243 = vld [vmem:[%s1241 + $0x4] sm:$0xf]
      %v1244 = vld [vmem:[%s1241 + $0x8] sm:$0xf]
      %v1245 = vld [vmem:[%s1241 + $0xc] sm:$0xf]
      %v1246 = vld [vmem:[%s1241 + $0x10] sm:$0xf]
      %v1247 = vld [vmem:[%s1241 + $0x14] sm:$0xf]
      %v1248 = vld [vmem:[%s1241 + $0x18] sm:$0xf]
      %v1249 = vld [vmem:[%s1241 + $0x1c] sm:$0xf]
      %v1250 = vld [vmem:[%s1241 + $0x20] sm:$0xf]
      %v1251 = vld [vmem:[%s1241 + $0x24] sm:$0xf]
      %v1252 = vld [vmem:[%s1241 + $0x28] sm:$0xf]
      %v1253 = vld [vmem:[%s1241 + $0x2c] sm:$0xf]
      %v1254 = vld [vmem:[%s1241 + $0x30] sm:$0xf]
      %v1255 = vld [vmem:[%s1241 + $0x34] sm:$0xf]
      %v1256 = vld [vmem:[%s1241 + $0x38] sm:$0xf]
      %v1257 = vld [vmem:[%s1241 + $0x3c] sm:$0xf]
      %v1258 = vlaneseq
      %v1259 = vshrl.u32 %v1258, 7
      %v1260 = vsub.s32 4, %v1259
      %v1261 = vrot.slane %v191, %v1260
      %v1278 = vunpack.c.l.b16 %v1242
      %v1279 = vunpack.c.l.b16 %v1243
      %v1280 = vunpack.c.l.b16 %v1244
      %v1281 = vunpack.c.l.b16 %v1245
      %v1282 = vunpack.c.l.b16 %v1246
      %v1283 = vunpack.c.l.b16 %v1247
      %v1284 = vunpack.c.l.b16 %v1248
      %v1285 = vunpack.c.l.b16 %v1249
      %v1286 = vunpack.c.l.b16 %v1250
      %v1287 = vunpack.c.l.b16 %v1251
      %v1288 = vunpack.c.l.b16 %v1252
      %v1289 = vunpack.c.l.b16 %v1253
      %v1290 = vunpack.c.l.b16 %v1254
      %v1291 = vunpack.c.l.b16 %v1255
      %v1292 = vunpack.c.l.b16 %v1256
      %v1293 = vunpack.c.l.b16 %v1257
      %v1294 = vpack.c.b16 %v1279, %v1278
      %v1295 = vpack.c.b16 %v1281, %v1280
      %v1296 = vpack.c.b16 %v1283, %v1282
      %v1297 = vpack.c.b16 %v1285, %v1284
      %v1298 = vpack.c.b16 %v1287, %v1286
      %v1299 = vpack.c.b16 %v1289, %v1288
      %v1300 = vpack.c.b16 %v1291, %v1290
      %v1301 = vpack.c.b16 %v1293, %v1292
      %1310 = vmatprep.subr.bf16.mxu0 0
      %1311 = vmatpush1.bf16.msra.mxu0 %v1301
      %1312 = vmatprep.subr.bf16.mxu0 0
      %1313 = vmatpush1.bf16.msra.mxu0 %v1300
      %1314 = vmatprep.subr.bf16.mxu0 0
      %1315 = vmatpush1.bf16.msra.mxu0 %v1299
      %1316 = vmatprep.subr.bf16.mxu0 0
      %1317 = vmatpush1.bf16.msra.mxu0 %v1298
      %1318 = vmatprep.subr.bf16.mxu0 0
      %1319 = vmatpush1.bf16.msra.mxu0 %v1297
      %1320 = vmatprep.subr.bf16.mxu0 0
      %1321 = vmatpush1.bf16.msra.mxu0 %v1296
      %1322 = vmatprep.subr.bf16.mxu0 0
      %1323 = vmatpush1.bf16.msra.mxu0 %v1295
      %1324 = vmatprep.subr.bf16.mxu0 0
      %1325 = vmatpush1.bf16.msra.mxu0 %v1294
      %1326 = vmatprep.subr.bf16.mxu0 0
      %1327 = vmatpush2.bf16.msra.mxu0 0
      %1328 = vmatprep.subr.bf16.mxu0 0
      %1329 = vmatpush2.bf16.msra.mxu0 0
      %1330 = vmatprep.subr.bf16.mxu0 0
      %1331 = vmatpush2.bf16.msra.mxu0 0
      %1332 = vmatprep.subr.bf16.mxu0 0
      %1333 = vmatpush2.bf16.msra.mxu0 0
      %1334 = vmatprep.subr.bf16.mxu0 0
      %1335 = vmatpush2.bf16.msra.mxu0 0
      %1336 = vmatprep.subr.bf16.mxu0 0
      %1337 = vmatpush2.bf16.msra.mxu0 0
      %1338 = vmatprep.subr.bf16.mxu0 0
      %1339 = vmatpush2.bf16.msra.mxu0 0
      %1340 = vmatprep.subr.bf16.mxu0 0
      %1341 = vmatpush2.bf16.msra.mxu0 0
      %1342 = vmatprep.mubr.bf16.mxu0 0
      %1343 = vmatmul.mubr.bf16.gmra.mxu0 %v1233
      %v1344 = vpop.f32.mrf.mxu0
      %v1345 = vadd.f32 %v1261, %v1344
      %v1346 = vpop.f32.mrf.mxu0
      %v1347 = vpop.f32.mrf.mxu0
      %v1348 = vadd.f32 %v1261, %v1347
      %v1349 = vpop.f32.mrf.mxu0
      %1350 = vmatprep.mubr.bf16.mxu0 0
      %1351 = vmatmul.mubr.bf16.gmra.mxu0 %v1234
      %v1352 = vpop.f32.mrf.mxu0
      %v1353 = vadd.f32 %v1261, %v1352
      %v1354 = vpop.f32.mrf.mxu0
      %v1355 = vpop.f32.mrf.mxu0
      %v1356 = vadd.f32 %v1261, %v1355
      %v1357 = vpop.f32.mrf.mxu0
      %1358 = vmatprep.mubr.bf16.mxu0 0
      %1359 = vmatmul.mubr.bf16.gmra.mxu0 %v1235
      %v1360 = vpop.f32.mrf.mxu0
      %v1361 = vadd.f32 %v1261, %v1360
      %v1362 = vpop.f32.mrf.mxu0
      %v1363 = vpop.f32.mrf.mxu0
      %v1364 = vadd.f32 %v1261, %v1363
      %v1365 = vpop.f32.mrf.mxu0
      %1366 = vmatprep.mubr.bf16.mxu0 0
      %1367 = vmatmul.mubr.bf16.gmra.mxu0 %v1236
      %v1368 = vpop.f32.mrf.mxu0
      %v1369 = vadd.f32 %v1261, %v1368
      %v1370 = vpop.f32.mrf.mxu0
      %v1371 = vpop.f32.mrf.mxu0
      %v1372 = vadd.f32 %v1261, %v1371
      %v1373 = vpop.f32.mrf.mxu0
      %1374 = vmatprep.mubr.bf16.mxu0 0
      %1375 = vmatmul.mubr.bf16.gmra.mxu0 %v1237
      %v1376 = vpop.f32.mrf.mxu0
      %v1377 = vadd.f32 %v1261, %v1376
      %v1378 = vpop.f32.mrf.mxu0
      %v1379 = vpop.f32.mrf.mxu0
      %v1380 = vadd.f32 %v1261, %v1379
      %v1381 = vpop.f32.mrf.mxu0
      %1382 = vmatprep.mubr.bf16.mxu0 0
      %1383 = vmatmul.mubr.bf16.gmra.mxu0 %v1238
      %v1384 = vpop.f32.mrf.mxu0
      %v1385 = vadd.f32 %v1261, %v1384
      %v1386 = vpop.f32.mrf.mxu0
      %v1387 = vpop.f32.mrf.mxu0
      %v1388 = vadd.f32 %v1261, %v1387
      %v1389 = vpop.f32.mrf.mxu0
      %1390 = vmatprep.mubr.bf16.mxu0 0
      %1391 = vmatmul.mubr.bf16.gmra.mxu0 %v1239
      %v1392 = vpop.f32.mrf.mxu0
      %v1393 = vadd.f32 %v1261, %v1392
      %v1394 = vpop.f32.mrf.mxu0
      %v1395 = vpop.f32.mrf.mxu0
      %v1396 = vadd.f32 %v1261, %v1395
      %v1397 = vpop.f32.mrf.mxu0
      %1398 = vmatprep.mubr.bf16.mxu0 0
      %1399 = vmatmul.mubr.bf16.gmra.mxu0 %v1240
      %v1400 = vpop.f32.mrf.mxu0
      %v1401 = vadd.f32 %v1261, %v1400
      %v1402 = vpop.f32.mrf.mxu0
      %v1403 = vpop.f32.mrf.mxu0
      %v1404 = vadd.f32 %v1261, %v1403
      %v1405 = vpop.f32.mrf.mxu0
      %1406 = vdwg.mxu0
      %v1407 = vtanh.pop %v1345
      %v1408 = vtanh.pop %v1348
      %v1409 = vtanh.pop %v1353
      %v1410 = vtanh.pop %v1356
      %v1411 = vtanh.pop %v1361
      %v1412 = vtanh.pop %v1364
      %v1413 = vtanh.pop %v1369
      %v1414 = vtanh.pop %v1372
      %v1415 = vtanh.pop %v1377
      %v1416 = vtanh.pop %v1380
      %v1417 = vtanh.pop %v1385
      %v1418 = vtanh.pop %v1388
      %v1419 = vtanh.pop %v1393
      %v1420 = vtanh.pop %v1396
      %v1421 = vtanh.pop %v1401
      %v1422 = vtanh.pop %v1404
      %v1423 = vpack.c.bf16 %v1408, %v1407
      %v1424 = vpack.c.bf16 %v1410, %v1409
      %v1425 = vpack.c.bf16 %v1412, %v1411
      %v1426 = vpack.c.bf16 %v1414, %v1413
      %v1427 = vpack.c.bf16 %v1416, %v1415
      %v1428 = vpack.c.bf16 %v1418, %v1417
      %v1429 = vpack.c.bf16 %v1420, %v1419
      %v1430 = vpack.c.bf16 %v1422, %v1421
      %s1431 = scalar_lea.vmem %s1, 384
      %v1432 = vld [vmem:[%s1431] sm:$0xf]
      %v1433 = vld [vmem:[%s1431 + $0x4] sm:$0xf]
      %v1434 = vld [vmem:[%s1431 + $0x8] sm:$0xf]
      %v1435 = vld [vmem:[%s1431 + $0xc] sm:$0xf]
      %v1436 = vld [vmem:[%s1431 + $0x10] sm:$0xf]
      %v1437 = vld [vmem:[%s1431 + $0x14] sm:$0xf]
      %v1438 = vld [vmem:[%s1431 + $0x18] sm:$0xf]
      %v1439 = vld [vmem:[%s1431 + $0x1c] sm:$0xf]
      %v1440 = vld [vmem:[%s1431 + $0x20] sm:$0xf]
      %v1441 = vld [vmem:[%s1431 + $0x24] sm:$0xf]
      %v1442 = vld [vmem:[%s1431 + $0x28] sm:$0xf]
      %v1443 = vld [vmem:[%s1431 + $0x2c] sm:$0xf]
      %v1444 = vld [vmem:[%s1431 + $0x30] sm:$0xf]
      %v1445 = vld [vmem:[%s1431 + $0x34] sm:$0xf]
      %v1446 = vld [vmem:[%s1431 + $0x38] sm:$0xf]
      %v1447 = vld [vmem:[%s1431 + $0x3c] sm:$0xf]
      %v1448 = vlaneseq
      %v1449 = vshrl.u32 %v1448, 7
      %v1450 = vsub.s32 5, %v1449
      %v1451 = vrot.slane %v191, %v1450
      %v1468 = vunpack.c.l.b16 %v1432
      %v1469 = vunpack.c.l.b16 %v1433
      %v1470 = vunpack.c.l.b16 %v1434
      %v1471 = vunpack.c.l.b16 %v1435
      %v1472 = vunpack.c.l.b16 %v1436
      %v1473 = vunpack.c.l.b16 %v1437
      %v1474 = vunpack.c.l.b16 %v1438
      %v1475 = vunpack.c.l.b16 %v1439
      %v1476 = vunpack.c.l.b16 %v1440
      %v1477 = vunpack.c.l.b16 %v1441
      %v1478 = vunpack.c.l.b16 %v1442
      %v1479 = vunpack.c.l.b16 %v1443
      %v1480 = vunpack.c.l.b16 %v1444
      %v1481 = vunpack.c.l.b16 %v1445
      %v1482 = vunpack.c.l.b16 %v1446
      %v1483 = vunpack.c.l.b16 %v1447
      %v1484 = vpack.c.b16 %v1469, %v1468
      %v1485 = vpack.c.b16 %v1471, %v1470
      %v1486 = vpack.c.b16 %v1473, %v1472
      %v1487 = vpack.c.b16 %v1475, %v1474
      %v1488 = vpack.c.b16 %v1477, %v1476
      %v1489 = vpack.c.b16 %v1479, %v1478
      %v1490 = vpack.c.b16 %v1481, %v1480
      %v1491 = vpack.c.b16 %v1483, %v1482
      %1500 = vmatprep.subr.bf16.mxu0 0
      %1501 = vmatpush1.bf16.msra.mxu0 %v1491
      %1502 = vmatprep.subr.bf16.mxu0 0
      %1503 = vmatpush1.bf16.msra.mxu0 %v1490
      %1504 = vmatprep.subr.bf16.mxu0 0
      %1505 = vmatpush1.bf16.msra.mxu0 %v1489
      %1506 = vmatprep.subr.bf16.mxu0 0
      %1507 = vmatpush1.bf16.msra.mxu0 %v1488
      %1508 = vmatprep.subr.bf16.mxu0 0
      %1509 = vmatpush1.bf16.msra.mxu0 %v1487
      %1510 = vmatprep.subr.bf16.mxu0 0
      %1511 = vmatpush1.bf16.msra.mxu0 %v1486
      %1512 = vmatprep.subr.bf16.mxu0 0
      %1513 = vmatpush1.bf16.msra.mxu0 %v1485
      %1514 = vmatprep.subr.bf16.mxu0 0
      %1515 = vmatpush1.bf16.msra.mxu0 %v1484
      %1516 = vmatprep.subr.bf16.mxu0 0
      %1517 = vmatpush2.bf16.msra.mxu0 0
      %1518 = vmatprep.subr.bf16.mxu0 0
      %1519 = vmatpush2.bf16.msra.mxu0 0
      %1520 = vmatprep.subr.bf16.mxu0 0
      %1521 = vmatpush2.bf16.msra.mxu0 0
      %1522 = vmatprep.subr.bf16.mxu0 0
      %1523 = vmatpush2.bf16.msra.mxu0 0
      %1524 = vmatprep.subr.bf16.mxu0 0
      %1525 = vmatpush2.bf16.msra.mxu0 0
      %1526 = vmatprep.subr.bf16.mxu0 0
      %1527 = vmatpush2.bf16.msra.mxu0 0
      %1528 = vmatprep.subr.bf16.mxu0 0
      %1529 = vmatpush2.bf16.msra.mxu0 0
      %1530 = vmatprep.subr.bf16.mxu0 0
      %1531 = vmatpush2.bf16.msra.mxu0 0
      %1532 = vmatprep.mubr.bf16.mxu0 0
      %1533 = vmatmul.mubr.bf16.gmra.mxu0 %v1423
      %v1534 = vpop.f32.mrf.mxu0
      %v1535 = vadd.f32 %v1451, %v1534
      %v1536 = vpop.f32.mrf.mxu0
      %v1537 = vpop.f32.mrf.mxu0
      %v1538 = vadd.f32 %v1451, %v1537
      %v1539 = vpop.f32.mrf.mxu0
      %1540 = vmatprep.mubr.bf16.mxu0 0
      %1541 = vmatmul.mubr.bf16.gmra.mxu0 %v1424
      %v1542 = vpop.f32.mrf.mxu0
      %v1543 = vadd.f32 %v1451, %v1542
      %v1544 = vpop.f32.mrf.mxu0
      %v1545 = vpop.f32.mrf.mxu0
      %v1546 = vadd.f32 %v1451, %v1545
      %v1547 = vpop.f32.mrf.mxu0
      %1548 = vmatprep.mubr.bf16.mxu0 0
      %1549 = vmatmul.mubr.bf16.gmra.mxu0 %v1425
      %v1550 = vpop.f32.mrf.mxu0
      %v1551 = vadd.f32 %v1451, %v1550
      %v1552 = vpop.f32.mrf.mxu0
      %v1553 = vpop.f32.mrf.mxu0
      %v1554 = vadd.f32 %v1451, %v1553
      %v1555 = vpop.f32.mrf.mxu0
      %1556 = vmatprep.mubr.bf16.mxu0 0
      %1557 = vmatmul.mubr.bf16.gmra.mxu0 %v1426
      %v1558 = vpop.f32.mrf.mxu0
      %v1559 = vadd.f32 %v1451, %v1558
      %v1560 = vpop.f32.mrf.mxu0
      %v1561 = vpop.f32.mrf.mxu0
      %v1562 = vadd.f32 %v1451, %v1561
      %v1563 = vpop.f32.mrf.mxu0
      %1564 = vmatprep.mubr.bf16.mxu0 0
      %1565 = vmatmul.mubr.bf16.gmra.mxu0 %v1427
      %v1566 = vpop.f32.mrf.mxu0
      %v1567 = vadd.f32 %v1451, %v1566
      %v1568 = vpop.f32.mrf.mxu0
      %v1569 = vpop.f32.mrf.mxu0
      %v1570 = vadd.f32 %v1451, %v1569
      %v1571 = vpop.f32.mrf.mxu0
      %1572 = vmatprep.mubr.bf16.mxu0 0
      %1573 = vmatmul.mubr.bf16.gmra.mxu0 %v1428
      %v1574 = vpop.f32.mrf.mxu0
      %v1575 = vadd.f32 %v1451, %v1574
      %v1576 = vpop.f32.mrf.mxu0
      %v1577 = vpop.f32.mrf.mxu0
      %v1578 = vadd.f32 %v1451, %v1577
      %v1579 = vpop.f32.mrf.mxu0
      %1580 = vmatprep.mubr.bf16.mxu0 0
      %1581 = vmatmul.mubr.bf16.gmra.mxu0 %v1429
      %v1582 = vpop.f32.mrf.mxu0
      %v1583 = vadd.f32 %v1451, %v1582
      %v1584 = vpop.f32.mrf.mxu0
      %v1585 = vpop.f32.mrf.mxu0
      %v1586 = vadd.f32 %v1451, %v1585
      %v1587 = vpop.f32.mrf.mxu0
      %1588 = vmatprep.mubr.bf16.mxu0 0
      %1589 = vmatmul.mubr.bf16.gmra.mxu0 %v1430
      %v1590 = vpop.f32.mrf.mxu0
      %v1591 = vadd.f32 %v1451, %v1590
      %v1592 = vpop.f32.mrf.mxu0
      %v1593 = vpop.f32.mrf.mxu0
      %v1594 = vadd.f32 %v1451, %v1593
      %v1595 = vpop.f32.mrf.mxu0
      %1596 = vdwg.mxu0
      %v1597 = vmax.f32 %v1535, -10.0
      %v1598 = vmax.f32 %v1538, -10.0
      %v1599 = vmax.f32 %v1543, -10.0
      %v1600 = vmax.f32 %v1546, -10.0
      %v1601 = vmax.f32 %v1551, -10.0
      %v1602 = vmax.f32 %v1554, -10.0
      %v1603 = vmax.f32 %v1559, -10.0
      %v1604 = vmax.f32 %v1562, -10.0
      %v1605 = vmax.f32 %v1567, -10.0
      %v1606 = vmax.f32 %v1570, -10.0
      %v1607 = vmax.f32 %v1575, -10.0
      %v1608 = vmax.f32 %v1578, -10.0
      %v1609 = vmax.f32 %v1583, -10.0
      %v1610 = vmax.f32 %v1586, -10.0
      %v1611 = vmax.f32 %v1591, -10.0
      %v1612 = vmax.f32 %v1594, -10.0
      %v1613 = vmin.f32 %v1597, 10.0
      %v1614 = vmin.f32 %v1598, 10.0
      %v1615 = vmin.f32 %v1599, 10.0
      %v1616 = vmin.f32 %v1600, 10.0
      %v1617 = vmin.f32 %v1601, 10.0
      %v1618 = vmin.f32 %v1602, 10.0
      %v1619 = vmin.f32 %v1603, 10.0
      %v1620 = vmin.f32 %v1604, 10.0
      %v1621 = vmin.f32 %v1605, 10.0
      %v1622 = vmin.f32 %v1606, 10.0
      %v1623 = vmin.f32 %v1607, 10.0
      %v1624 = vmin.f32 %v1608, 10.0
      %v1625 = vmin.f32 %v1609, 10.0
      %v1626 = vmin.f32 %v1610, 10.0
      %v1627 = vmin.f32 %v1611, 10.0
      %v1628 = vmin.f32 %v1612, 10.0
      %1629 = vst [vmem:[%s172] sm:$0xff] %v1613
      %1630 = vst [vmem:[%s172 + $0x8] sm:$0xff] %v1614
      %1631 = vst [vmem:[%s172 + $0x10] sm:$0xff] %v1615
      %1632 = vst [vmem:[%s172 + $0x18] sm:$0xff] %v1616
      %1633 = vst [vmem:[%s172 + $0x20] sm:$0xff] %v1617
      %1634 = vst [vmem:[%s172 + $0x28] sm:$0xff] %v1618
      %1635 = vst [vmem:[%s172 + $0x30] sm:$0xff] %v1619
      %1636 = vst [vmem:[%s172 + $0x38] sm:$0xff] %v1620
      %1637 = vst [vmem:[%s172 + $0x40] sm:$0xff] %v1621
      %1638 = vst [vmem:[%s172 + $0x48] sm:$0xff] %v1622
      %1639 = vst [vmem:[%s172 + $0x50] sm:$0xff] %v1623
      %1640 = vst [vmem:[%s172 + $0x58] sm:$0xff] %v1624
      %1641 = vst [vmem:[%s172 + $0x60] sm:$0xff] %v1625
      %1642 = vst [vmem:[%s172 + $0x68] sm:$0xff] %v1626
      %1643 = vst [vmem:[%s172 + $0x70] sm:$0xff] %v1627
      %1644 = vst [vmem:[%s172 + $0x78] sm:$0xff] %v1628
      %s1645 = smul.u32 16, %s14
      %p1646 = scmp.lt.s32.totalorder %s1645, 31
      %s1647 = scalar_select %p1646, %s1645, 31
      %s1648 = smul.addr %s1647, 8
      %s1649 = scalar_lea.vmem %s3, %s1648
      // Predicated region
      $region33: #{koopman_bilinear_forward.1} parent=31 // pred_check
        %p1650 = pneg %p100
      $region34: #{koopman_bilinear_forward.1} parent=31 // pred_check_branch
        %1652 = sbr.rel (%p1650) target = $region36
      $region35: #{koopman_bilinear_forward.1} parent=31 // pred_region
        %s1653 = smul.u32 16, %s14
      $region36: #{koopman_bilinear_forward.1} parent=31 // pred_fallthru
        _
    $region32: #{koopman_bilinear_forward.1} parent=5 // pred_fallthru
      _
    %p1654 = scmp.le.s32.totalorder 2, %s9
    // Predicated region
    $region37: #{koopman_bilinear_forward.1} parent=5 // pred_check
      %p1655 = pneg %p1654
    $region38: #{koopman_bilinear_forward.1} parent=5 // pred_check_branch
      %1657 = sbr.rel (%p1655) target = $region40
    $region39: #{koopman_bilinear_forward.1} parent=5 // pred_region
      %s1658 = ssub.s32 %s9, 2
      // Predicated region
      $region41: #{koopman_bilinear_forward.1} parent=39 // pred_check
        %p1659 = pneg %p106
      $region42: #{koopman_bilinear_forward.1} parent=39 // pred_check_branch
        %1661 = sbr.rel (%p1659) target = $region44
      $region43: #{koopman_bilinear_forward.1} parent=39 // pred_region
        %s1662 = smul.u32 16, %s15
        %p1663 = scmp.lt.s32.totalorder %s1662, 31
        %s1664 = scalar_select %p1663, %s1662, 31
        %s1665 = smul.addr %s1664, 8
        %s1666 = scalar_lea.vmem %s3, %s1665
      $region44: #{koopman_bilinear_forward.1} parent=39 // pred_fallthru
        _
    $region40: #{koopman_bilinear_forward.1} parent=5 // pred_fallthru
      _
  $region6: #{koopman_bilinear_forward.1} parent=0 // loop_footer
    %s13 = sadd.s32 1, %s9
  $region7: #{koopman_bilinear_forward.1} parent=0 // loop_footer_branch
    %8 = sbr.rel target = $region3
  $region8: #{koopman_bilinear_forward.1} parent=0 // loop_exit
    _

</llo_original>
